<compile_context>
chip_gen: v7x
topology: tpu7x:2x2x1
jax: 0.10.0
libtpu: 0.0.40
codegen_flags: <defaults>
</compile_context>

<pallas_src>
import functools

import jax
import jax.numpy as jnp
import numpy as np
from jax.experimental import pallas as pl
from jax.experimental.pallas import tpu as pltpu

HIDDEN = 512          # fixed by the module (self.hidden_dim = 512)
EPS = 1e-9            # matches torch.log(total_mask_prob + 1e-09)
TM = 512              # tokens per grid step (lane-dense tile width)


def _mask_kernel(scal_ref, xt_ref, w1t_ref, b1_ref, w2_ref, noise_ref,
                 out_ref, *, inv_tau):
    # ---- Linear(D->H) + PReLU, tokens on lanes -----------------------------
    h = jnp.dot(w1t_ref[...], xt_ref[...],
                preferred_element_type=jnp.float32)            # (H, TM) f32
    h = h + b1_ref[...]                                        # + b1 (H, 1)
    alpha = scal_ref[0]                                        # PReLU weight
    h = jnp.where(h >= 0.0, h, alpha * h)

    # ---- Linear(H->1) + Sigmoid, lane-dense result --------------------------
    logit = jnp.dot(w2_ref[...], h,
                    preferred_element_type=jnp.float32) + scal_ref[1]  # (1, TM)
    p = jax.nn.sigmoid(logit)                                   # (1, TM)

    # ---- hard gumbel-softmax over {1-p, p}; forward value of [..., 1] -------
    # TODO(synk): straight-through gradient of F.gumbel_softmax(hard=True) is
    # not implemented (forward-only kernel, no custom_vjp).
    g0 = noise_ref[0, 0:1, :]                                   # (1, TM)
    g1 = noise_ref[0, 1:2, :]                                   # (1, TM)
    z0 = (jnp.log(1.0 - p + EPS) + g0) * inv_tau
    z1 = (jnp.log(p + EPS) + g1) * inv_tau
    hard = (z1 > z0).astype(jnp.float32)                        # (1, TM)

    # packed lane-dense output block: row 0 = probs, row 1 = hard mask
    out_ref[0, 0:1, :] = p
    out_ref[0, 1:2, :] = hard


def mask_generator_forward(x, params, key, *, tau=1.0):
    """x: (B, L, D) float32 -> (probs (B, L, 1), hard_mask (B, L, 1))."""
    w1, b1, alpha, w2, b2 = params
    B, L, D = x.shape
    N = B * L
    n_tiles = pl.cdiv(N, TM)

    # Tokens on the lane axis; bf16 feeds the MXU and halves x's HBM bytes.
    xt = x.reshape(N, D).T.astype(jnp.bfloat16)                 # (D, N)
    w1t = w1.T.astype(jnp.bfloat16)                             # (H, D)
    b1_col = b1.reshape(HIDDEN, 1).astype(jnp.float32)          # (H, 1)
    w2_row = w2.reshape(1, HIDDEN).astype(jnp.float32)          # (1, H)
    scalars = jnp.array([alpha, b2], dtype=jnp.float32)         # [prelu_alpha, b2]
    noise = jax.random.gumbel(key, (n_tiles, 2, TM), dtype=jnp.float32)

    out = pl.pallas_call(
        functools.partial(_mask_kernel, inv_tau=1.0 / float(tau)),
        out_shape=jax.ShapeDtypeStruct((n_tiles, 2, TM), jnp.float32),
        grid=(n_tiles,),
        in_specs=[
            pl.BlockSpec(memory_space=pltpu.MemorySpace.SMEM),  # [alpha, b2]
            pl.BlockSpec((D, TM), lambda i: (0, i)),            # xT tile (bf16)
            pl.BlockSpec((HIDDEN, D), lambda i: (0, 0)),        # W1^T  (bf16)
            pl.BlockSpec((HIDDEN, 1), lambda i: (0, 0)),        # b1 column
            pl.BlockSpec((1, HIDDEN), lambda i: (0, 0)),        # W2 row
            pl.BlockSpec((1, 2, TM), lambda i: (i, 0, 0)),      # gumbel noise
        ],
        out_specs=pl.BlockSpec((1, 2, TM), lambda i: (i, 0, 0)),
        compiler_params=pltpu.CompilerParams(
            dimension_semantics=("parallel",),     # independent tiles; v7x 2-TC shard
            vmem_limit_bytes=48 * 1024 * 1024),
    )(scalars, xt, w1t, b1_col, w2_row, noise)

    probs = out[:, 0, :].reshape(n_tiles * TM)[:N].reshape(B, L, 1)
    hard = out[:, 1, :].reshape(n_tiles * TM)[:N].reshape(B, L, 1)
    return probs, hard


def init_params(key, dim_token):
    k1, k2, k3, k4 = jax.random.split(key, 4)
    w1 = jax.random.normal(k1, (dim_token, HIDDEN), jnp.float32) * 0.05
    b1 = jax.random.normal(k2, (HIDDEN,), jnp.float32) * 0.05
    alpha = jnp.float32(0.25)                       # PReLU default init
    w2 = jax.random.normal(k3, (HIDDEN, 1), jnp.float32) * 0.05
    b2 = jax.random.normal(k4, (1,), jnp.float32)[0] * 0.05
    return (w1, b1, alpha, w2, b2)


def _reference_probs(x, params):
    """Pure-JAX f32 reference for the deterministic MLP part (sanity check)."""
    w1, b1, alpha, w2, b2 = params
    h = x @ w1 + b1
    h = jnp.where(h >= 0.0, h, alpha * h)
    return jax.nn.sigmoid(h @ w2 + b2)


if __name__ == "__main__":
    key = jax.random.PRNGKey(0)
    k_x, k_p, k_noise = jax.random.split(key, 3)

    B, L, D = 2, 8, 32          # batch, len_token, dim_token
    x = jax.random.normal(k_x, (B, L, D), jnp.float32)
    params = init_params(k_p, D)

    probs, hard = mask_generator_forward(x, params, k_noise, tau=1.0)
    probs = jax.block_until_ready(probs)
    hard = jax.block_until_ready(hard)

    # sanity: MLP path matches pure-JAX reference (bf16 matmul tolerance),
    # hard mask is binary, shapes match the torch module.
    ref = _reference_probs(x, params)
    assert probs.shape == (B, L, 1) and hard.shape == (B, L, 1)
    assert np.allclose(np.asarray(probs), np.asarray(ref), atol=1e-2), "probs mismatch"
    hv = np.asarray(hard)
    assert np.all((hv == 0.0) | (hv == 1.0)), "hard mask not binary"

    print("KERNEL_OK")
</pallas_src>

<mosaic_0001>
module attributes {stable_mosaic.version = 11 : i64} {
  func.func @_mask_kernel(%arg0: i32, %arg1: memref<2xf32, #tpu.memory_space<smem>>, %arg2: memref<32x512xbf16, #tpu.memory_space<vmem>>, %arg3: memref<512x32xbf16, #tpu.memory_space<vmem>>, %arg4: memref<512x1xf32, #tpu.memory_space<vmem>>, %arg5: memref<1x512xf32, #tpu.memory_space<vmem>>, %arg6: memref<1x2x512xf32, #tpu.memory_space<vmem>>, %arg7: memref<1x2x512xf32, #tpu.memory_space<vmem>>) attributes {dimension_semantics = [#tpu.dimension_semantics<parallel>], iteration_bounds = array<i64: 1>, scalar_prefetch = 0 : i64, scratch_operands = 0 : i64, tpu.core_type = #tpu.core_type<tc>, window_params = [{transform_indices = @transform_0, window_bounds = array<i64: 2>}, {transform_indices = @transform_1, window_bounds = array<i64: 32, 512>}, {pipeline_mode = #tpu.pipeline_mode<synchronous>, transform_indices = @transform_2, window_bounds = array<i64: 512, 32>}, {pipeline_mode = #tpu.pipeline_mode<synchronous>, transform_indices = @transform_3, window_bounds = array<i64: 512, 1>}, {pipeline_mode = #tpu.pipeline_mode<synchronous>, transform_indices = @transform_4, window_bounds = array<i64: 1, 512>}, {transform_indices = @transform_5, window_bounds = array<i64: 1, 2, 512>}, {transform_indices = @transform_6, window_bounds = array<i64: 1, 2, 512>}]} {
    %c0 = arith.constant 0 : index
    %c0_0 = arith.constant 0 : index
    %0 = vector.load %arg3[%c0, %c0_0] : memref<512x32xbf16, #tpu.memory_space<vmem>>, vector<512x32xbf16>
    %c0_1 = arith.constant 0 : index
    %c0_2 = arith.constant 0 : index
    %1 = vector.load %arg2[%c0_1, %c0_2] : memref<32x512xbf16, #tpu.memory_space<vmem>>, vector<32x512xbf16>
    %cst = arith.constant dense<0.000000e+00> : vector<512x512xf32>
    %2 = tpu.matmul %0, %1, %cst {dimension_numbers = #tpu.dot_dimension_numbers<[1], [0], [0], [1], [0, 0, 1, 1], [], []>} : vector<512x32xbf16>, vector<32x512xbf16>, vector<512x512xf32> -> vector<512x512xf32>
    %c0_3 = arith.constant 0 : index
    %c0_4 = arith.constant 0 : index
    %3 = vector.load %arg4[%c0_3, %c0_4] : memref<512x1xf32, #tpu.memory_space<vmem>>, vector<512x1xf32>
    %4 = vector.broadcast %3 : vector<512x1xf32> to vector<512x512xf32>
    %5 = arith.addf %2, %4 : vector<512x512xf32>
    %c0_5 = arith.constant 0 : index
    %6 = memref.load %arg1[%c0_5] : memref<2xf32, #tpu.memory_space<smem>>
    %cst_6 = arith.constant 0.000000e+00 : f32
    %7 = vector.broadcast %cst_6 : f32 to vector<512x512xf32>
    %8 = arith.cmpf oge, %5, %7 : vector<512x512xf32>
    %9 = vector.broadcast %6 : f32 to vector<512x512xf32>
    %10 = arith.mulf %9, %5 : vector<512x512xf32>
    %11 = arith.select %8, %5, %10 : vector<512x512xi1>, vector<512x512xf32>
    %c0_7 = arith.constant 0 : index
    %c0_8 = arith.constant 0 : index
    %12 = vector.load %arg5[%c0_7, %c0_8] : memref<1x512xf32, #tpu.memory_space<vmem>>, vector<1x512xf32>
    %cst_9 = arith.constant dense<0.000000e+00> : vector<1x512xf32>
    %13 = tpu.matmul %12, %11, %cst_9 {dimension_numbers = #tpu.dot_dimension_numbers<[1], [0], [0], [1], [0, 0, 1, 1], [], []>} : vector<1x512xf32>, vector<512x512xf32>, vector<1x512xf32> -> vector<1x512xf32>
    %c1 = arith.constant 1 : index
    %14 = memref.load %arg1[%c1] : memref<2xf32, #tpu.memory_space<smem>>
    %15 = vector.broadcast %14 : f32 to vector<1x512xf32>
    %16 = arith.addf %13, %15 : vector<1x512xf32>
    %17 = arith.negf %16 : vector<1x512xf32>
    %18 = math.exp %17 : vector<1x512xf32>
    %cst_10 = arith.constant 1.000000e+00 : f32
    %19 = vector.broadcast %cst_10 : f32 to vector<1x512xf32>
    %20 = arith.addf %19, %18 : vector<1x512xf32>
    %21 = arith.divf %19, %20 : vector<1x512xf32>
    %c0_11 = arith.constant 0 : index
    %c0_12 = arith.constant 0 : index
    %c0_13 = arith.constant 0 : index
    %22 = vector.load %arg6[%c0_11, %c0_12, %c0_13] : memref<1x2x512xf32, #tpu.memory_space<vmem>>, vector<1x1x512xf32>
    %23 = vector.shape_cast %22 : vector<1x1x512xf32> to vector<1x512xf32>
    %c0_14 = arith.constant 0 : index
    %c1_15 = arith.constant 1 : index
    %c0_16 = arith.constant 0 : index
    %24 = vector.load %arg6[%c0_14, %c1_15, %c0_16] : memref<1x2x512xf32, #tpu.memory_space<vmem>>, vector<1x1x512xf32>
    %25 = vector.shape_cast %24 : vector<1x1x512xf32> to vector<1x512xf32>
    %cst_17 = arith.constant 1.000000e+00 : f32
    %26 = vector.broadcast %cst_17 : f32 to vector<1x512xf32>
    %27 = arith.subf %26, %21 : vector<1x512xf32>
    %cst_18 = arith.constant 9.99999971E-10 : f32
    %28 = vector.broadcast %cst_18 : f32 to vector<1x512xf32>
    %29 = arith.addf %27, %28 : vector<1x512xf32>
    %30 = math.log %29 : vector<1x512xf32>
    %31 = arith.addf %30, %23 : vector<1x512xf32>
    %cst_19 = arith.constant 1.000000e+00 : f32
    %32 = vector.broadcast %cst_19 : f32 to vector<1x512xf32>
    %33 = arith.mulf %31, %32 : vector<1x512xf32>
    %cst_20 = arith.constant 9.99999971E-10 : f32
    %34 = vector.broadcast %cst_20 : f32 to vector<1x512xf32>
    %35 = arith.addf %21, %34 : vector<1x512xf32>
    %36 = math.log %35 : vector<1x512xf32>
    %37 = arith.addf %36, %25 : vector<1x512xf32>
    %cst_21 = arith.constant 1.000000e+00 : f32
    %38 = vector.broadcast %cst_21 : f32 to vector<1x512xf32>
    %39 = arith.mulf %37, %38 : vector<1x512xf32>
    %40 = arith.cmpf ogt, %39, %33 : vector<1x512xf32>
    %41 = arith.extui %40 : vector<1x512xi1> to vector<1x512xi32>
    %42 = arith.sitofp %41 : vector<1x512xi32> to vector<1x512xf32>
    %c0_22 = arith.constant 0 : index
    %c0_23 = arith.constant 0 : index
    %c0_24 = arith.constant 0 : index
    %43 = vector.load %arg7[%c0_22, %c0_23, %c0_24] : memref<1x2x512xf32, #tpu.memory_space<vmem>>, vector<1x1x512xf32>
    %44 = vector.shape_cast %43 : vector<1x1x512xf32> to vector<1x512xf32>
    %45 = vector.shape_cast %21 : vector<1x512xf32> to vector<1x1x512xf32>
    tpu.vector_store %arg7[%c0_22, %c0_23, %c0_24], %45 {strides = array<i32>} : memref<1x2x512xf32, #tpu.memory_space<vmem>>, vector<1x1x512xf32>,
    %c0_25 = arith.constant 0 : index
    %c1_26 = arith.constant 1 : index
    %c0_27 = arith.constant 0 : index
    %46 = vector.load %arg7[%c0_25, %c1_26, %c0_27] : memref<1x2x512xf32, #tpu.memory_space<vmem>>, vector<1x1x512xf32>
    %47 = vector.shape_cast %46 : vector<1x1x512xf32> to vector<1x512xf32>
    %48 = vector.shape_cast %42 : vector<1x512xf32> to vector<1x1x512xf32>
    tpu.vector_store %arg7[%c0_25, %c1_26, %c0_27], %48 {strides = array<i32>} : memref<1x2x512xf32, #tpu.memory_space<vmem>>, vector<1x1x512xf32>,
    return
  }
  func.func @transform_0(%arg0: i32) -> i32 {
    %c0_i32 = arith.constant 0 : i32
    %c0_i32_0 = arith.constant 0 : i32
    return %c0_i32 : i32
  }
  func.func @transform_1(%arg0: i32) -> (i32, i32) {
    %c0_i32 = arith.constant 0 : i32
    %c0_i32_0 = arith.constant 0 : i32
    return %c0_i32, %arg0 : i32, i32
  }
  func.func @transform_2(%arg0: i32) -> (i32, i32) {
    %c0_i32 = arith.constant 0 : i32
    %c0_i32_0 = arith.constant 0 : i32
    %c0_i32_1 = arith.constant 0 : i32
    return %c0_i32, %c0_i32_0 : i32, i32
  }
  func.func @transform_3(%arg0: i32) -> (i32, i32) {
    %c0_i32 = arith.constant 0 : i32
    %c0_i32_0 = arith.constant 0 : i32
    %c0_i32_1 = arith.constant 0 : i32
    return %c0_i32, %c0_i32_0 : i32, i32
  }
  func.func @transform_4(%arg0: i32) -> (i32, i32) {
    %c0_i32 = arith.constant 0 : i32
    %c0_i32_0 = arith.constant 0 : i32
    %c0_i32_1 = arith.constant 0 : i32
    return %c0_i32, %c0_i32_0 : i32, i32
  }
  func.func @transform_5(%arg0: i32) -> (i32, i32, i32) {
    %c0_i32 = arith.constant 0 : i32
    %c0_i32_0 = arith.constant 0 : i32
    %c0_i32_1 = arith.constant 0 : i32
    return %arg0, %c0_i32, %c0_i32_0 : i32, i32, i32
  }
  func.func @transform_6(%arg0: i32) -> (i32, i32, i32) {
    %c0_i32 = arith.constant 0 : i32
    %c0_i32_0 = arith.constant 0 : i32
    %c0_i32_1 = arith.constant 0 : i32
    return %arg0, %c0_i32, %c0_i32_0 : i32, i32, i32
  }
}

</mosaic_0001>

<llo_original>
// kernel: tpu_custom_call.1
$region0: #{tpu_custom_call.1}
  #allocation0 [shape = 'u32[]', space=smem, size = 0x4, offset = 0x4, fixed_abs, tag = 'smem constant byte address 0x4 - core index']
  #allocation1 [shape = 'u32[144,128]{1,0:T(1,128)}', space=vmem, size = 0x12000, scoped, tag = 'internal scratch']
  %s0 = inlined_call_operand.vmem [shape: f32[2], index: 0, kind: input, shape index: {}]
  %s1 = inlined_call_operand.vmem [shape: bf16[32,16], index: 1, kind: input, shape index: {}]
  %s2 = inlined_call_operand.vmem [shape: bf16[512,32], index: 2, kind: input, shape index: {}]
  %s3 = inlined_call_operand.vmem [shape: f32[512,1], index: 3, kind: input, shape index: {}]
  %s4 = inlined_call_operand.vmem [shape: f32[1,512], index: 4, kind: input, shape index: {}]
  %s5 = inlined_call_operand.vmem [shape: f32[1,2,512], index: 5, kind: input, shape index: {}]
  %s6 = inlined_call_operand.hbm [shape: f32[1,2,512], index: 6, kind: output, shape index: {}]
  %s7 = sld [smem:[#allocation0]]
  $region79: #{tpu_custom_call.1} parent=0
    _
  %s9 = ssub.s32 1, %s7
  %s10 = scalar_select 0, %s9, %s7
  $region1: #{tpu_custom_call.1} parent=0
    #allocation2 [shape = 'u8[512]{0}', space=smem, size = 0x200, scoped, tag = 'input window, operand 0, single buffered']
    #allocation3 [shape = 's32[1]{0}', space=sflag, size = 0x4, scoped, tag = 'scoped memory for tpu_custom_call.1']
    #allocation4 [shape = 's32[1]{0}', space=sflag, size = 0x4, scoped, tag = 'scoped memory for tpu_custom_call.1']
    #allocation5 [shape = 'u8[32768]{0}', space=vmem, size = 0x8000, scoped, tag = 'input window, operand 1, single buffered']
    #allocation6 [shape = 'u8[4096]{0}', space=vmem, size = 0x1000, scoped, tag = 'output window, operand 0, single buffered']
    %11 = vsyncpa [#allocation4], 0
    %12 = vsyncpa [#allocation3], 0
    // Predicated region
    $region2: #{tpu_custom_call.1} parent=1 // pred_check
      _
    $region3: #{tpu_custom_call.1} parent=1 // pred_check_branch
      %14 = sbr.rel (0) target = $region5
    $region4: #{tpu_custom_call.1} parent=1 // pred_region
      %s16 = ssub.s32 16, 16
      %17 = vsyncadd [#allocation4], %s16
      %s19 = sshll.u32 %s0, 4
      %s20 = int_to_ptr.vmem [resolvable:$true] %s19
      %22 = dma.vmem_to_smem %s20, 16, [#allocation2], [#allocation4]
    $region5: #{tpu_custom_call.1} parent=1 // pred_fallthru
      _
    // Predicated region
    $region6: #{tpu_custom_call.1} parent=1 // pred_check
      _
    $region7: #{tpu_custom_call.1} parent=1 // pred_check_branch
      %24 = sbr.rel (0) target = $region9
    $region8: #{tpu_custom_call.1} parent=1 // pred_region
      // Predicated region
      $region10: #{tpu_custom_call.1} parent=8 // pred_check
        _
      $region11: #{tpu_custom_call.1} parent=8 // pred_check_branch
        %26 = sbr.rel (0) target = $region13
      $region12: #{tpu_custom_call.1} parent=8 // pred_region
        // Predicated region
        $region14: #{tpu_custom_call.1} parent=12 // pred_check
          _
        $region15: #{tpu_custom_call.1} parent=12 // pred_check_branch
          %28 = sbr.rel target = $region17
        $region16: #{tpu_custom_call.1} parent=12 // pred_region
          // Predicated region
          $region29: #{tpu_custom_call.1} parent=16 // pred_check
            _
          $region30: #{tpu_custom_call.1} parent=16 // pred_check_branch
            %49 = sbr.rel (0) target = $region32
          $region31: #{tpu_custom_call.1} parent=16 // pred_region
            loop: start=0, step=1, limit=1
            $region33: #{tpu_custom_call.1} parent=31 // loop_pre_header
              _
            $region34: #{tpu_custom_call.1} parent=31 // loop_header
              %s51 = sphi 0, %s55
              %p52 = scmp.ge.s32.totalorder %s51, 1
              %s56 = sphi %s1, %s1
              %s57 = sphi [#allocation5], [#allocation5]
            $region35: #{tpu_custom_call.1} parent=31 // loop_header_branch
              %54 = sbr.rel (%p52) target = $region39
            $region36: #{tpu_custom_call.1} parent=31 // loop_body
              _
            $region37: #{tpu_custom_call.1} parent=31 // loop_footer
              %s55 = sadd.s32 1, %s51
            $region38: #{tpu_custom_call.1} parent=31 // loop_footer_branch
              %50 = sbr.rel target = $region34
            $region39: #{tpu_custom_call.1} parent=31 // loop_exit
              _
            loop: start=0, step=1, limit=1
            $region40: #{tpu_custom_call.1} parent=31 // loop_pre_header
              _
            $region41: #{tpu_custom_call.1} parent=31 // loop_header
              %s60 = sphi 0, %s64
              %p61 = scmp.ge.s32.totalorder %s60, 1
              %s65 = sphi %s1, %s1
              %s66 = sphi [#allocation5], [#allocation5]
            $region42: #{tpu_custom_call.1} parent=31 // loop_header_branch
              %63 = sbr.rel (%p61) target = $region46
            $region43: #{tpu_custom_call.1} parent=31 // loop_body
              %v67 = vld [vmem:[%s65] sm:$0xf]
              %68 = vst [vmem:[%s66] sm:$0xf] %v67
              %v69 = vld [vmem:[%s65 + $0x4] sm:$0xf]
              %70 = vst [vmem:[%s66 + $0x10] sm:$0xf] %v69
              %v71 = vld [vmem:[%s65 + $0x8] sm:$0xf]
              %72 = vst [vmem:[%s66 + $0x20] sm:$0xf] %v71
              %v73 = vld [vmem:[%s65 + $0xc] sm:$0xf]
              %74 = vst [vmem:[%s66 + $0x30] sm:$0xf] %v73
            $region44: #{tpu_custom_call.1} parent=31 // loop_footer
              %s64 = sadd.s32 1, %s60
            $region45: #{tpu_custom_call.1} parent=31 // loop_footer_branch
              %59 = sbr.rel target = $region41
            $region46: #{tpu_custom_call.1} parent=31 // loop_exit
              _
          $region32: #{tpu_custom_call.1} parent=16 // pred_fallthru
            _
        $region17: #{tpu_custom_call.1} parent=12 // pred_fallthru
          _
        // Predicated region
        $region18: #{tpu_custom_call.1} parent=12 // pred_check
          _
        $region19: #{tpu_custom_call.1} parent=12 // pred_check_branch
          %30 = sbr.rel (0) target = $region21
        $region20: #{tpu_custom_call.1} parent=12 // pred_region
          loop: start=0, step=1, limit=1
          $region22: #{tpu_custom_call.1} parent=20 // loop_pre_header
            _
          $region23: #{tpu_custom_call.1} parent=20 // loop_header
            %s33 = sphi 0, %s37
            %p34 = scmp.ge.s32.totalorder %s33, 1
            %s38 = sphi %s1, %s1
            %s39 = sphi [#allocation5], [#allocation5]
          $region24: #{tpu_custom_call.1} parent=20 // loop_header_branch
            %36 = sbr.rel (%p34) target = $region28
          $region25: #{tpu_custom_call.1} parent=20 // loop_body
            %v40 = vld [vmem:[%s38] sm:$0xf]
            %41 = vst [vmem:[%s39] sm:$0xf] %v40
            %v42 = vld [vmem:[%s38 + $0x4] sm:$0xf]
            %43 = vst [vmem:[%s39 + $0x10] sm:$0xf] %v42
            %v44 = vld [vmem:[%s38 + $0x8] sm:$0xf]
            %45 = vst [vmem:[%s39 + $0x20] sm:$0xf] %v44
            %v46 = vld [vmem:[%s38 + $0xc] sm:$0xf]
            %47 = vst [vmem:[%s39 + $0x30] sm:$0xf] %v46
          $region26: #{tpu_custom_call.1} parent=20 // loop_footer
            %s37 = sadd.s32 1, %s33
          $region27: #{tpu_custom_call.1} parent=20 // loop_footer_branch
            %32 = sbr.rel target = $region23
          $region28: #{tpu_custom_call.1} parent=20 // loop_exit
            _
        $region21: #{tpu_custom_call.1} parent=12 // pred_fallthru
          _
      $region13: #{tpu_custom_call.1} parent=8 // pred_fallthru
        _
      %75 = vnop
    $region9: #{tpu_custom_call.1} parent=1 // pred_fallthru
      _
    // Predicated region
    $region47: #{tpu_custom_call.1} parent=1 // pred_check
      _
    $region48: #{tpu_custom_call.1} parent=1 // pred_check_branch
      %77 = sbr.rel (0) target = $region50
    $region49: #{tpu_custom_call.1} parent=1 // pred_region
      _
    $region50: #{tpu_custom_call.1} parent=1 // pred_fallthru
      _
    // Predicated region
    $region51: #{tpu_custom_call.1} parent=1 // pred_check
      _
    $region52: #{tpu_custom_call.1} parent=1 // pred_check_branch
      %79 = sbr.rel (0) target = $region54
    $region53: #{tpu_custom_call.1} parent=1 // pred_region
      _
    $region54: #{tpu_custom_call.1} parent=1 // pred_fallthru
      _
    // Predicated region
    $region55: #{tpu_custom_call.1} parent=1 // pred_check
      _
    $region56: #{tpu_custom_call.1} parent=1 // pred_check_branch
      %81 = sbr.rel (0) target = $region58
    $region57: #{tpu_custom_call.1} parent=1 // pred_region
      _
    $region58: #{tpu_custom_call.1} parent=1 // pred_fallthru
      _
    // Predicated region
    $region59: #{tpu_custom_call.1} parent=1 // pred_check
      _
    $region60: #{tpu_custom_call.1} parent=1 // pred_check_branch
      %83 = sbr.rel (0) target = $region62
    $region61: #{tpu_custom_call.1} parent=1 // pred_region
      _
    $region62: #{tpu_custom_call.1} parent=1 // pred_fallthru
      _
    // Predicated region
    $region63: #{tpu_custom_call.1} parent=1 // pred_check
      _
    $region64: #{tpu_custom_call.1} parent=1 // pred_check_branch
      %85 = sbr.rel (0) target = $region66
    $region65: #{tpu_custom_call.1} parent=1 // pred_region
      %86 = dma.done [#allocation4], 16
    $region66: #{tpu_custom_call.1} parent=1 // pred_fallthru
      _
    // Predicated region
    $region67: #{tpu_custom_call.1} parent=1 // pred_check
      _
    $region68: #{tpu_custom_call.1} parent=1 // pred_check_branch
      %88 = sbr.rel (0) target = $region70
    $region69: #{tpu_custom_call.1} parent=1 // pred_region
      _
    $region70: #{tpu_custom_call.1} parent=1 // pred_fallthru
      _
    %89 = sfence
    %v91 = vld [vmem:[%s2] sm:$0xf]
    %v92 = vld [vmem:[%s2 + $0x4] sm:$0xf]
    %v93 = vld [vmem:[%s2 + $0x8] sm:$0xf]
    %v94 = vld [vmem:[%s2 + $0xc] sm:$0xf]
    %v95 = vld [vmem:[%s2 + $0x10] sm:$0xf]
    %v96 = vld [vmem:[%s2 + $0x14] sm:$0xf]
    %v97 = vld [vmem:[%s2 + $0x18] sm:$0xf]
    %v98 = vld [vmem:[%s2 + $0x1c] sm:$0xf]
    %v99 = vld [vmem:[%s2 + $0x20] sm:$0xf]
    %v100 = vld [vmem:[%s2 + $0x24] sm:$0xf]
    %v101 = vld [vmem:[%s2 + $0x28] sm:$0xf]
    %v102 = vld [vmem:[%s2 + $0x2c] sm:$0xf]
    %v103 = vld [vmem:[%s2 + $0x30] sm:$0xf]
    %v104 = vld [vmem:[%s2 + $0x34] sm:$0xf]
    %v105 = vld [vmem:[%s2 + $0x38] sm:$0xf]
    %v106 = vld [vmem:[%s2 + $0x3c] sm:$0xf]
    %v107 = vld [vmem:[%s2 + $0x40] sm:$0xf]
    %v108 = vld [vmem:[%s2 + $0x44] sm:$0xf]
    %v109 = vld [vmem:[%s2 + $0x48] sm:$0xf]
    %v110 = vld [vmem:[%s2 + $0x4c] sm:$0xf]
    %v111 = vld [vmem:[%s2 + $0x50] sm:$0xf]
    %v112 = vld [vmem:[%s2 + $0x54] sm:$0xf]
    %v113 = vld [vmem:[%s2 + $0x58] sm:$0xf]
    %v114 = vld [vmem:[%s2 + $0x5c] sm:$0xf]
    %v115 = vld [vmem:[%s2 + $0x60] sm:$0xf]
    %v116 = vld [vmem:[%s2 + $0x64] sm:$0xf]
    %v117 = vld [vmem:[%s2 + $0x68] sm:$0xf]
    %v118 = vld [vmem:[%s2 + $0x6c] sm:$0xf]
    %v119 = vld [vmem:[%s2 + $0x70] sm:$0xf]
    %v120 = vld [vmem:[%s2 + $0x74] sm:$0xf]
    %v121 = vld [vmem:[%s2 + $0x78] sm:$0xf]
    %v122 = vld [vmem:[%s2 + $0x7c] sm:$0xf]
    %v123 = vld [vmem:[%s2 + $0x80] sm:$0xf]
    %v124 = vld [vmem:[%s2 + $0x84] sm:$0xf]
    %v125 = vld [vmem:[%s2 + $0x88] sm:$0xf]
    %v126 = vld [vmem:[%s2 + $0x8c] sm:$0xf]
    %v127 = vld [vmem:[%s2 + $0x90] sm:$0xf]
    %v128 = vld [vmem:[%s2 + $0x94] sm:$0xf]
    %v129 = vld [vmem:[%s2 + $0x98] sm:$0xf]
    %v130 = vld [vmem:[%s2 + $0x9c] sm:$0xf]
    %v131 = vld [vmem:[%s2 + $0xa0] sm:$0xf]
    %v132 = vld [vmem:[%s2 + $0xa4] sm:$0xf]
    %v133 = vld [vmem:[%s2 + $0xa8] sm:$0xf]
    %v134 = vld [vmem:[%s2 + $0xac] sm:$0xf]
    %v135 = vld [vmem:[%s2 + $0xb0] sm:$0xf]
    %v136 = vld [vmem:[%s2 + $0xb4] sm:$0xf]
    %v137 = vld [vmem:[%s2 + $0xb8] sm:$0xf]
    %v138 = vld [vmem:[%s2 + $0xbc] sm:$0xf]
    %v139 = vld [vmem:[%s2 + $0xc0] sm:$0xf]
    %v140 = vld [vmem:[%s2 + $0xc4] sm:$0xf]
    %v141 = vld [vmem:[%s2 + $0xc8] sm:$0xf]
    %v142 = vld [vmem:[%s2 + $0xcc] sm:$0xf]
    %v143 = vld [vmem:[%s2 + $0xd0] sm:$0xf]
    %v144 = vld [vmem:[%s2 + $0xd4] sm:$0xf]
    %v145 = vld [vmem:[%s2 + $0xd8] sm:$0xf]
    %v146 = vld [vmem:[%s2 + $0xdc] sm:$0xf]
    %v147 = vld [vmem:[%s2 + $0xe0] sm:$0xf]
    %v148 = vld [vmem:[%s2 + $0xe4] sm:$0xf]
    %v149 = vld [vmem:[%s2 + $0xe8] sm:$0xf]
    %v150 = vld [vmem:[%s2 + $0xec] sm:$0xf]
    %v151 = vld [vmem:[%s2 + $0xf0] sm:$0xf]
    %v152 = vld [vmem:[%s2 + $0xf4] sm:$0xf]
    %v153 = vld [vmem:[%s2 + $0xf8] sm:$0xf]
    %v154 = vld [vmem:[%s2 + $0xfc] sm:$0xf]
    %v155 = vld [vmem:[#allocation5] sm:$0xff]
    %v156 = vld [vmem:[#allocation5 + $0x8] sm:$0xff]
    %v157 = vld [vmem:[#allocation5 + $0x10] sm:$0xff]
    %v158 = vld [vmem:[#allocation5 + $0x18] sm:$0xff]
    %v159 = vld [vmem:[#allocation5 + $0x20] sm:$0xff]
    %v160 = vld [vmem:[#allocation5 + $0x28] sm:$0xff]
    %v161 = vld [vmem:[#allocation5 + $0x30] sm:$0xff]
    %v162 = vld [vmem:[#allocation5 + $0x38] sm:$0xff]
    %v163 = vld [vmem:[%s3] sm:$0xff]
    %v164 = vld [vmem:[%s3 + $0x8] sm:$0xff]
    %v165 = vld [vmem:[%s3 + $0x10] sm:$0xff]
    %v166 = vld [vmem:[%s3 + $0x18] sm:$0xff]
    %v167 = vld [vmem:[%s3 + $0x20] sm:$0xff]
    %v168 = vld [vmem:[%s3 + $0x28] sm:$0xff]
    %v169 = vld [vmem:[%s3 + $0x30] sm:$0xff]
    %v170 = vld [vmem:[%s3 + $0x38] sm:$0xff]
    %v171 = vld [vmem:[%s3 + $0x40] sm:$0xff]
    %v172 = vld [vmem:[%s3 + $0x48] sm:$0xff]
    %v173 = vld [vmem:[%s3 + $0x50] sm:$0xff]
    %v174 = vld [vmem:[%s3 + $0x58] sm:$0xff]
    %v175 = vld [vmem:[%s3 + $0x60] sm:$0xff]
    %v176 = vld [vmem:[%s3 + $0x68] sm:$0xff]
    %v177 = vld [vmem:[%s3 + $0x70] sm:$0xff]
    %v178 = vld [vmem:[%s3 + $0x78] sm:$0xff]
    %v179 = vld [vmem:[%s3 + $0x80] sm:$0xff]
    %v180 = vld [vmem:[%s3 + $0x88] sm:$0xff]
    %v181 = vld [vmem:[%s3 + $0x90] sm:$0xff]
    %v182 = vld [vmem:[%s3 + $0x98] sm:$0xff]
    %v183 = vld [vmem:[%s3 + $0xa0] sm:$0xff]
    %v184 = vld [vmem:[%s3 + $0xa8] sm:$0xff]
    %v185 = vld [vmem:[%s3 + $0xb0] sm:$0xff]
    %v186 = vld [vmem:[%s3 + $0xb8] sm:$0xff]
    %v187 = vld [vmem:[%s3 + $0xc0] sm:$0xff]
    %v188 = vld [vmem:[%s3 + $0xc8] sm:$0xff]
    %v189 = vld [vmem:[%s3 + $0xd0] sm:$0xff]
    %v190 = vld [vmem:[%s3 + $0xd8] sm:$0xff]
    %v191 = vld [vmem:[%s3 + $0xe0] sm:$0xff]
    %v192 = vld [vmem:[%s3 + $0xe8] sm:$0xff]
    %v193 = vld [vmem:[%s3 + $0xf0] sm:$0xff]
    %v194 = vld [vmem:[%s3 + $0xf8] sm:$0xff]
    %v195 = vld [vmem:[%s3 + $0x100] sm:$0xff]
    %v196 = vld [vmem:[%s3 + $0x108] sm:$0xff]
    %v197 = vld [vmem:[%s3 + $0x110] sm:$0xff]
    %v198 = vld [vmem:[%s3 + $0x118] sm:$0xff]
    %v199 = vld [vmem:[%s3 + $0x120] sm:$0xff]
    %v200 = vld [vmem:[%s3 + $0x128] sm:$0xff]
    %v201 = vld [vmem:[%s3 + $0x130] sm:$0xff]
    %v202 = vld [vmem:[%s3 + $0x138] sm:$0xff]
    %v203 = vld [vmem:[%s3 + $0x140] sm:$0xff]
    %v204 = vld [vmem:[%s3 + $0x148] sm:$0xff]
    %v205 = vld [vmem:[%s3 + $0x150] sm:$0xff]
    %v206 = vld [vmem:[%s3 + $0x158] sm:$0xff]
    %v207 = vld [vmem:[%s3 + $0x160] sm:$0xff]
    %v208 = vld [vmem:[%s3 + $0x168] sm:$0xff]
    %v209 = vld [vmem:[%s3 + $0x170] sm:$0xff]
    %v210 = vld [vmem:[%s3 + $0x178] sm:$0xff]
    %v211 = vld [vmem:[%s3 + $0x180] sm:$0xff]
    %v212 = vld [vmem:[%s3 + $0x188] sm:$0xff]
    %v213 = vld [vmem:[%s3 + $0x190] sm:$0xff]
    %v214 = vld [vmem:[%s3 + $0x198] sm:$0xff]
    %v215 = vld [vmem:[%s3 + $0x1a0] sm:$0xff]
    %v216 = vld [vmem:[%s3 + $0x1a8] sm:$0xff]
    %v217 = vld [vmem:[%s3 + $0x1b0] sm:$0xff]
    %v218 = vld [vmem:[%s3 + $0x1b8] sm:$0xff]
    %v219 = vld [vmem:[%s3 + $0x1c0] sm:$0xff]
    %v220 = vld [vmem:[%s3 + $0x1c8] sm:$0xff]
    %v221 = vld [vmem:[%s3 + $0x1d0] sm:$0xff]
    %v222 = vld [vmem:[%s3 + $0x1d8] sm:$0xff]
    %v223 = vld [vmem:[%s3 + $0x1e0] sm:$0xff]
    %v224 = vld [vmem:[%s3 + $0x1e8] sm:$0xff]
    %v225 = vld [vmem:[%s3 + $0x1f0] sm:$0xff]
    %v226 = vld [vmem:[%s3 + $0x1f8] sm:$0xff]
    %228 = vset.pattern.permute.xlu0 0
    %229 = vperm.xlu0 %228, %v163
    %v230 = vpop.permute.xlu0 %229
    %233 = vset.pattern.permute.xlu0 0
    %234 = vperm.xlu0 %233, %v164
    %v235 = vpop.permute.xlu0 %234
    %238 = vset.pattern.permute.xlu0 0
    %239 = vperm.xlu0 %238, %v165
    %v240 = vpop.permute.xlu0 %239
    %243 = vset.pattern.permute.xlu0 0
    %244 = vperm.xlu0 %243, %v166
    %v245 = vpop.permute.xlu0 %244
    %248 = vset.pattern.permute.xlu0 0
    %249 = vperm.xlu0 %248, %v167
    %v250 = vpop.permute.xlu0 %249
    %253 = vset.pattern.permute.xlu0 0
    %254 = vperm.xlu0 %253, %v168
    %v255 = vpop.permute.xlu0 %254
    %258 = vset.pattern.permute.xlu0 0
    %259 = vperm.xlu0 %258, %v169
    %v260 = vpop.permute.xlu0 %259
    %263 = vset.pattern.permute.xlu0 0
    %264 = vperm.xlu0 %263, %v170
    %v265 = vpop.permute.xlu0 %264
    %268 = vset.pattern.permute.xlu0 0
    %269 = vperm.xlu0 %268, %v171
    %v270 = vpop.permute.xlu0 %269
    %273 = vset.pattern.permute.xlu0 0
    %274 = vperm.xlu0 %273, %v172
    %v275 = vpop.permute.xlu0 %274
    %278 = vset.pattern.permute.xlu0 0
    %279 = vperm.xlu0 %278, %v173
    %v280 = vpop.permute.xlu0 %279
    %283 = vset.pattern.permute.xlu0 0
    %284 = vperm.xlu0 %283, %v174
    %v285 = vpop.permute.xlu0 %284
    %288 = vset.pattern.permute.xlu0 0
    %289 = vperm.xlu0 %288, %v175
    %v290 = vpop.permute.xlu0 %289
    %293 = vset.pattern.permute.xlu0 0
    %294 = vperm.xlu0 %293, %v176
    %v295 = vpop.permute.xlu0 %294
    %298 = vset.pattern.permute.xlu0 0
    %299 = vperm.xlu0 %298, %v177
    %v300 = vpop.permute.xlu0 %299
    %303 = vset.pattern.permute.xlu0 0
    %304 = vperm.xlu0 %303, %v178
    %v305 = vpop.permute.xlu0 %304
    %308 = vset.pattern.permute.xlu0 0
    %309 = vperm.xlu0 %308, %v179
    %v310 = vpop.permute.xlu0 %309
    %313 = vset.pattern.permute.xlu0 0
    %314 = vperm.xlu0 %313, %v180
    %v315 = vpop.permute.xlu0 %314
    %318 = vset.pattern.permute.xlu0 0
    %319 = vperm.xlu0 %318, %v181
    %v320 = vpop.permute.xlu0 %319
    %323 = vset.pattern.permute.xlu0 0
    %324 = vperm.xlu0 %323, %v182
    %v325 = vpop.permute.xlu0 %324
    %328 = vset.pattern.permute.xlu0 0
    %329 = vperm.xlu0 %328, %v183
    %v330 = vpop.permute.xlu0 %329
    %333 = vset.pattern.permute.xlu0 0
    %334 = vperm.xlu0 %333, %v184
    %v335 = vpop.permute.xlu0 %334
    %338 = vset.pattern.permute.xlu0 0
    %339 = vperm.xlu0 %338, %v185
    %v340 = vpop.permute.xlu0 %339
    %343 = vset.pattern.permute.xlu0 0
    %344 = vperm.xlu0 %343, %v186
    %v345 = vpop.permute.xlu0 %344
    %348 = vset.pattern.permute.xlu0 0
    %349 = vperm.xlu0 %348, %v187
    %v350 = vpop.permute.xlu0 %349
    %353 = vset.pattern.permute.xlu0 0
    %354 = vperm.xlu0 %353, %v188
    %v355 = vpop.permute.xlu0 %354
    %358 = vset.pattern.permute.xlu0 0
    %359 = vperm.xlu0 %358, %v189
    %v360 = vpop.permute.xlu0 %359
    %363 = vset.pattern.permute.xlu0 0
    %364 = vperm.xlu0 %363, %v190
    %v365 = vpop.permute.xlu0 %364
    %368 = vset.pattern.permute.xlu0 0
    %369 = vperm.xlu0 %368, %v191
    %v370 = vpop.permute.xlu0 %369
    %373 = vset.pattern.permute.xlu0 0
    %374 = vperm.xlu0 %373, %v192
    %v375 = vpop.permute.xlu0 %374
    %378 = vset.pattern.permute.xlu0 0
    %379 = vperm.xlu0 %378, %v193
    %v380 = vpop.permute.xlu0 %379
    %383 = vset.pattern.permute.xlu0 0
    %384 = vperm.xlu0 %383, %v194
    %v385 = vpop.permute.xlu0 %384
    %388 = vset.pattern.permute.xlu0 0
    %389 = vperm.xlu0 %388, %v195
    %v390 = vpop.permute.xlu0 %389
    %393 = vset.pattern.permute.xlu0 0
    %394 = vperm.xlu0 %393, %v196
    %v395 = vpop.permute.xlu0 %394
    %398 = vset.pattern.permute.xlu0 0
    %399 = vperm.xlu0 %398, %v197
    %v400 = vpop.permute.xlu0 %399
    %403 = vset.pattern.permute.xlu0 0
    %404 = vperm.xlu0 %403, %v198
    %v405 = vpop.permute.xlu0 %404
    %408 = vset.pattern.permute.xlu0 0
    %409 = vperm.xlu0 %408, %v199
    %v410 = vpop.permute.xlu0 %409
    %413 = vset.pattern.permute.xlu0 0
    %414 = vperm.xlu0 %413, %v200
    %v415 = vpop.permute.xlu0 %414
    %418 = vset.pattern.permute.xlu0 0
    %419 = vperm.xlu0 %418, %v201
    %v420 = vpop.permute.xlu0 %419
    %423 = vset.pattern.permute.xlu0 0
    %424 = vperm.xlu0 %423, %v202
    %v425 = vpop.permute.xlu0 %424
    %428 = vset.pattern.permute.xlu0 0
    %429 = vperm.xlu0 %428, %v203
    %v430 = vpop.permute.xlu0 %429
    %433 = vset.pattern.permute.xlu0 0
    %434 = vperm.xlu0 %433, %v204
    %v435 = vpop.permute.xlu0 %434
    %438 = vset.pattern.permute.xlu0 0
    %439 = vperm.xlu0 %438, %v205
    %v440 = vpop.permute.xlu0 %439
    %443 = vset.pattern.permute.xlu0 0
    %444 = vperm.xlu0 %443, %v206
    %v445 = vpop.permute.xlu0 %444
    %448 = vset.pattern.permute.xlu0 0
    %449 = vperm.xlu0 %448, %v207
    %v450 = vpop.permute.xlu0 %449
    %453 = vset.pattern.permute.xlu0 0
    %454 = vperm.xlu0 %453, %v208
    %v455 = vpop.permute.xlu0 %454
    %458 = vset.pattern.permute.xlu0 0
    %459 = vperm.xlu0 %458, %v209
    %v460 = vpop.permute.xlu0 %459
    %463 = vset.pattern.permute.xlu0 0
    %464 = vperm.xlu0 %463, %v210
    %v465 = vpop.permute.xlu0 %464
    %468 = vset.pattern.permute.xlu0 0
    %469 = vperm.xlu0 %468, %v211
    %v470 = vpop.permute.xlu0 %469
    %473 = vset.pattern.permute.xlu0 0
    %474 = vperm.xlu0 %473, %v212
    %v475 = vpop.permute.xlu0 %474
    %478 = vset.pattern.permute.xlu0 0
    %479 = vperm.xlu0 %478, %v213
    %v480 = vpop.permute.xlu0 %479
    %483 = vset.pattern.permute.xlu0 0
    %484 = vperm.xlu0 %483, %v214
    %v485 = vpop.permute.xlu0 %484
    %488 = vset.pattern.permute.xlu0 0
    %489 = vperm.xlu0 %488, %v215
    %v490 = vpop.permute.xlu0 %489
    %493 = vset.pattern.permute.xlu0 0
    %494 = vperm.xlu0 %493, %v216
    %v495 = vpop.permute.xlu0 %494
    %498 = vset.pattern.permute.xlu0 0
    %499 = vperm.xlu0 %498, %v217
    %v500 = vpop.permute.xlu0 %499
    %503 = vset.pattern.permute.xlu0 0
    %504 = vperm.xlu0 %503, %v218
    %v505 = vpop.permute.xlu0 %504
    %508 = vset.pattern.permute.xlu0 0
    %509 = vperm.xlu0 %508, %v219
    %v510 = vpop.permute.xlu0 %509
    %513 = vset.pattern.permute.xlu0 0
    %514 = vperm.xlu0 %513, %v220
    %v515 = vpop.permute.xlu0 %514
    %518 = vset.pattern.permute.xlu0 0
    %519 = vperm.xlu0 %518, %v221
    %v520 = vpop.permute.xlu0 %519
    %523 = vset.pattern.permute.xlu0 0
    %524 = vperm.xlu0 %523, %v222
    %v525 = vpop.permute.xlu0 %524
    %528 = vset.pattern.permute.xlu0 0
    %529 = vperm.xlu0 %528, %v223
    %v530 = vpop.permute.xlu0 %529
    %533 = vset.pattern.permute.xlu0 0
    %534 = vperm.xlu0 %533, %v224
    %v535 = vpop.permute.xlu0 %534
    %538 = vset.pattern.permute.xlu0 0
    %539 = vperm.xlu0 %538, %v225
    %v540 = vpop.permute.xlu0 %539
    %543 = vset.pattern.permute.xlu0 0
    %544 = vperm.xlu0 %543, %v226
    %v545 = vpop.permute.xlu0 %544
    %v611 = vunpack.c.l.b16 %v91
    %v612 = vunpack.c.l.b16 %v92
    %v613 = vunpack.c.l.b16 %v93
    %v614 = vunpack.c.l.b16 %v94
    %v615 = vunpack.c.l.b16 %v95
    %v616 = vunpack.c.l.b16 %v96
    %v617 = vunpack.c.l.b16 %v97
    %v618 = vunpack.c.l.b16 %v98
    %v619 = vunpack.c.l.b16 %v99
    %v620 = vunpack.c.l.b16 %v100
    %v621 = vunpack.c.l.b16 %v101
    %v622 = vunpack.c.l.b16 %v102
    %v623 = vunpack.c.l.b16 %v103
    %v624 = vunpack.c.l.b16 %v104
    %v625 = vunpack.c.l.b16 %v105
    %v626 = vunpack.c.l.b16 %v106
    %v627 = vunpack.c.l.b16 %v107
    %v628 = vunpack.c.l.b16 %v108
    %v629 = vunpack.c.l.b16 %v109
    %v630 = vunpack.c.l.b16 %v110
    %v631 = vunpack.c.l.b16 %v111
    %v632 = vunpack.c.l.b16 %v112
    %v633 = vunpack.c.l.b16 %v113
    %v634 = vunpack.c.l.b16 %v114
    %v635 = vunpack.c.l.b16 %v115
    %v636 = vunpack.c.l.b16 %v116
    %v637 = vunpack.c.l.b16 %v117
    %v638 = vunpack.c.l.b16 %v118
    %v639 = vunpack.c.l.b16 %v119
    %v640 = vunpack.c.l.b16 %v120
    %v641 = vunpack.c.l.b16 %v121
    %v642 = vunpack.c.l.b16 %v122
    %v643 = vunpack.c.l.b16 %v123
    %v644 = vunpack.c.l.b16 %v124
    %v645 = vunpack.c.l.b16 %v125
    %v646 = vunpack.c.l.b16 %v126
    %v647 = vunpack.c.l.b16 %v127
    %v648 = vunpack.c.l.b16 %v128
    %v649 = vunpack.c.l.b16 %v129
    %v650 = vunpack.c.l.b16 %v130
    %v651 = vunpack.c.l.b16 %v131
    %v652 = vunpack.c.l.b16 %v132
    %v653 = vunpack.c.l.b16 %v133
    %v654 = vunpack.c.l.b16 %v134
    %v655 = vunpack.c.l.b16 %v135
    %v656 = vunpack.c.l.b16 %v136
    %v657 = vunpack.c.l.b16 %v137
    %v658 = vunpack.c.l.b16 %v138
    %v659 = vunpack.c.l.b16 %v139
    %v660 = vunpack.c.l.b16 %v140
    %v661 = vunpack.c.l.b16 %v141
    %v662 = vunpack.c.l.b16 %v142
    %v663 = vunpack.c.l.b16 %v143
    %v664 = vunpack.c.l.b16 %v144
    %v665 = vunpack.c.l.b16 %v145
    %v666 = vunpack.c.l.b16 %v146
    %v667 = vunpack.c.l.b16 %v147
    %v668 = vunpack.c.l.b16 %v148
    %v669 = vunpack.c.l.b16 %v149
    %v670 = vunpack.c.l.b16 %v150
    %v671 = vunpack.c.l.b16 %v151
    %v672 = vunpack.c.l.b16 %v152
    %v673 = vunpack.c.l.b16 %v153
    %v674 = vunpack.c.l.b16 %v154
    %v675 = vpack.c.b16 %v612, %v611
    %v676 = vpack.c.b16 %v614, %v613
    %v677 = vpack.c.b16 %v616, %v615
    %v678 = vpack.c.b16 %v618, %v617
    %v679 = vpack.c.b16 %v620, %v619
    %v680 = vpack.c.b16 %v622, %v621
    %v681 = vpack.c.b16 %v624, %v623
    %v682 = vpack.c.b16 %v626, %v625
    %v683 = vpack.c.b16 %v628, %v627
    %v684 = vpack.c.b16 %v630, %v629
    %v685 = vpack.c.b16 %v632, %v631
    %v686 = vpack.c.b16 %v634, %v633
    %v687 = vpack.c.b16 %v636, %v635
    %v688 = vpack.c.b16 %v638, %v637
    %v689 = vpack.c.b16 %v640, %v639
    %v690 = vpack.c.b16 %v642, %v641
    %v691 = vpack.c.b16 %v644, %v643
    %v692 = vpack.c.b16 %v646, %v645
    %v693 = vpack.c.b16 %v648, %v647
    %v694 = vpack.c.b16 %v650, %v649
    %v695 = vpack.c.b16 %v652, %v651
    %v696 = vpack.c.b16 %v654, %v653
    %v697 = vpack.c.b16 %v656, %v655
    %v698 = vpack.c.b16 %v658, %v657
    %v699 = vpack.c.b16 %v660, %v659
    %v700 = vpack.c.b16 %v662, %v661
    %v701 = vpack.c.b16 %v664, %v663
    %v702 = vpack.c.b16 %v666, %v665
    %v703 = vpack.c.b16 %v668, %v667
    %v704 = vpack.c.b16 %v670, %v669
    %v705 = vpack.c.b16 %v672, %v671
    %v706 = vpack.c.b16 %v674, %v673
    %v715 = vunpack.c.l.b16 %v155
    %v716 = vunpack.c.h.b16 %v155
    %v717 = vunpack.c.l.b16 %v156
    %v718 = vunpack.c.h.b16 %v156
    %v719 = vunpack.c.l.b16 %v157
    %v720 = vunpack.c.h.b16 %v157
    %v721 = vunpack.c.l.b16 %v158
    %v722 = vunpack.c.h.b16 %v158
    %v723 = vunpack.c.l.b16 %v159
    %v724 = vunpack.c.h.b16 %v159
    %v725 = vunpack.c.l.b16 %v160
    %v726 = vunpack.c.h.b16 %v160
    %v727 = vunpack.c.l.b16 %v161
    %v728 = vunpack.c.h.b16 %v161
    %v729 = vunpack.c.l.b16 %v162
    %v730 = vunpack.c.h.b16 %v162
    %v731 = vpack.c.b16 %v719, %v715
    %v732 = vpack.c.b16 %v720, %v716
    %v733 = vpack.c.b16 %v721, %v717
    %v734 = vpack.c.b16 %v722, %v718
    %v735 = vpack.c.b16 %v727, %v723
    %v736 = vpack.c.b16 %v728, %v724
    %v737 = vpack.c.b16 %v729, %v725
    %v738 = vpack.c.b16 %v730, %v726
    %vm747 = vcmask 261120
    %v749 = vsel %vm747, %v675, 0
    %v752 = vsel %vm747, %v676, 0
    %v755 = vsel %vm747, %v677, 0
    %v758 = vsel %vm747, %v678, 0
    %v761 = vsel %vm747, %v679, 0
    %v764 = vsel %vm747, %v680, 0
    %v767 = vsel %vm747, %v681, 0
    %v770 = vsel %vm747, %v682, 0
    %v773 = vsel %vm747, %v683, 0
    %v776 = vsel %vm747, %v684, 0
    %v779 = vsel %vm747, %v685, 0
    %v782 = vsel %vm747, %v686, 0
    %v785 = vsel %vm747, %v687, 0
    %v788 = vsel %vm747, %v688, 0
    %v791 = vsel %vm747, %v689, 0
    %v794 = vsel %vm747, %v690, 0
    %v797 = vsel %vm747, %v691, 0
    %v800 = vsel %vm747, %v692, 0
    %v803 = vsel %vm747, %v693, 0
    %v806 = vsel %vm747, %v694, 0
    %v809 = vsel %vm747, %v695, 0
    %v812 = vsel %vm747, %v696, 0
    %v815 = vsel %vm747, %v697, 0
    %v818 = vsel %vm747, %v698, 0
    %v821 = vsel %vm747, %v699, 0
    %v824 = vsel %vm747, %v700, 0
    %v827 = vsel %vm747, %v701, 0
    %v830 = vsel %vm747, %v702, 0
    %v833 = vsel %vm747, %v703, 0
    %v836 = vsel %vm747, %v704, 0
    %v839 = vsel %vm747, %v705, 0
    %v842 = vsel %vm747, %v706, 0
    %844 = vmatprep.subr.bf16.mxu0 %v732
    %845 = vmatpush1.bf16.msra.mxu0 %v731
    %846 = vmatprep.subr.bf16.mxu0 %v736
    %847 = vmatpush1.bf16.msra.mxu0 %v735
    %848 = vmatprep.subr.bf16.mxu0 0
    %849 = vmatpush1.bf16.msra.mxu0 0
    %850 = vmatprep.subr.bf16.mxu0 0
    %851 = vmatpush1.bf16.msra.mxu0 0
    %852 = vmatprep.subr.bf16.mxu0 0
    %853 = vmatpush1.bf16.msra.mxu0 0
    %854 = vmatprep.subr.bf16.mxu0 0
    %855 = vmatpush1.bf16.msra.mxu0 0
    %856 = vmatprep.subr.bf16.mxu0 0
    %857 = vmatpush1.bf16.msra.mxu0 0
    %858 = vmatprep.subr.bf16.mxu0 0
    %859 = vmatpush1.bf16.msra.mxu0 0
    %860 = vmatprep.subr.bf16.mxu0 0
    %861 = vmatpush1.bf16.msra.mxu0 0
    %862 = vmatprep.subr.bf16.mxu0 0
    %863 = vmatpush1.bf16.msra.mxu0 0
    %864 = vmatprep.subr.bf16.mxu0 0
    %865 = vmatpush1.bf16.msra.mxu0 0
    %866 = vmatprep.subr.bf16.mxu0 0
    %867 = vmatpush1.bf16.msra.mxu0 0
    %868 = vmatprep.subr.bf16.mxu0 0
    %869 = vmatpush1.bf16.msra.mxu0 0
    %870 = vmatprep.subr.bf16.mxu0 0
    %871 = vmatpush1.bf16.msra.mxu0 0
    %872 = vmatprep.subr.bf16.mxu0 0
    %873 = vmatpush1.bf16.msra.mxu0 0
    %874 = vmatprep.subr.bf16.mxu0 0
    %875 = vmatpush1.bf16.msra.mxu0 0
    %876 = vmatprep.mubr.bf16.mxu0 0
    %877 = vmatmul.mubr.bf16.gmra.mrb[0].mxu0 %v749
    %v878 = vpop.f32.mrb[0].mxu0
    %v879 = vadd.f32 %v230, %v878
    %v880 = vpop.f32.mrb[0].mxu0
    %v881 = vadd.f32 %v230, %v880
    %v882 = vpop.f32.mrb[0].mxu0
    %v883 = vadd.f32 %v235, %v882
    %v884 = vpop.f32.mrb[0].mxu0
    %v885 = vadd.f32 %v235, %v884
    %886 = vmatprep.mubr.bf16.mxu0 0
    %887 = vmatmul.mubr.bf16.gmra.mrb[0].mxu0 %v752
    %v888 = vpop.f32.mrb[0].mxu0
    %v889 = vadd.f32 %v240, %v888
    %v890 = vpop.f32.mrb[0].mxu0
    %v891 = vadd.f32 %v240, %v890
    %v892 = vpop.f32.mrb[0].mxu0
    %v893 = vadd.f32 %v245, %v892
    %v894 = vpop.f32.mrb[0].mxu0
    %v895 = vadd.f32 %v245, %v894
    %896 = vmatprep.mubr.bf16.mxu0 0
    %897 = vmatmul.mubr.bf16.gmra.mrb[0].mxu0 %v755
    %v898 = vpop.f32.mrb[0].mxu0
    %v899 = vadd.f32 %v250, %v898
    %v900 = vpop.f32.mrb[0].mxu0
    %v901 = vadd.f32 %v250, %v900
    %v902 = vpop.f32.mrb[0].mxu0
    %v903 = vadd.f32 %v255, %v902
    %v904 = vpop.f32.mrb[0].mxu0
    %v905 = vadd.f32 %v255, %v904
    %906 = vmatprep.mubr.bf16.mxu0 0
    %907 = vmatmul.mubr.bf16.gmra.mrb[0].mxu0 %v758
    %v908 = vpop.f32.mrb[0].mxu0
    %v909 = vadd.f32 %v260, %v908
    %v910 = vpop.f32.mrb[0].mxu0
    %v911 = vadd.f32 %v260, %v910
    %v912 = vpop.f32.mrb[0].mxu0
    %v913 = vadd.f32 %v265, %v912
    %v914 = vpop.f32.mrb[0].mxu0
    %v915 = vadd.f32 %v265, %v914
    %916 = vmatprep.mubr.bf16.mxu0 0
    %917 = vmatmul.mubr.bf16.gmra.mrb[0].mxu0 %v761
    %v918 = vpop.f32.mrb[0].mxu0
    %v919 = vadd.f32 %v270, %v918
    %v920 = vpop.f32.mrb[0].mxu0
    %v921 = vadd.f32 %v270, %v920
    %v922 = vpop.f32.mrb[0].mxu0
    %v923 = vadd.f32 %v275, %v922
    %v924 = vpop.f32.mrb[0].mxu0
    %v925 = vadd.f32 %v275, %v924
    %926 = vmatprep.mubr.bf16.mxu0 0
    %927 = vmatmul.mubr.bf16.gmra.mrb[0].mxu0 %v764
    %v928 = vpop.f32.mrb[0].mxu0
    %v929 = vadd.f32 %v280, %v928
    %v930 = vpop.f32.mrb[0].mxu0
    %v931 = vadd.f32 %v280, %v930
    %v932 = vpop.f32.mrb[0].mxu0
    %v933 = vadd.f32 %v285, %v932
    %v934 = vpop.f32.mrb[0].mxu0
    %v935 = vadd.f32 %v285, %v934
    %936 = vmatprep.mubr.bf16.mxu0 0
    %937 = vmatmul.mubr.bf16.gmra.mrb[0].mxu0 %v767
    %v938 = vpop.f32.mrb[0].mxu0
    %v939 = vadd.f32 %v290, %v938
    %v940 = vpop.f32.mrb[0].mxu0
    %v941 = vadd.f32 %v290, %v940
    %v942 = vpop.f32.mrb[0].mxu0
    %v943 = vadd.f32 %v295, %v942
    %v944 = vpop.f32.mrb[0].mxu0
    %v945 = vadd.f32 %v295, %v944
    %946 = vmatprep.mubr.bf16.mxu0 0
    %947 = vmatmul.mubr.bf16.gmra.mrb[0].mxu0 %v770
    %v948 = vpop.f32.mrb[0].mxu0
    %v949 = vadd.f32 %v300, %v948
    %v950 = vpop.f32.mrb[0].mxu0
    %v951 = vadd.f32 %v300, %v950
    %v952 = vpop.f32.mrb[0].mxu0
    %v953 = vadd.f32 %v305, %v952
    %v954 = vpop.f32.mrb[0].mxu0
    %v955 = vadd.f32 %v305, %v954
    %956 = vmatprep.mubr.bf16.mxu0 0
    %957 = vmatmul.mubr.bf16.gmra.mrb[0].mxu0 %v773
    %v958 = vpop.f32.mrb[0].mxu0
    %v959 = vadd.f32 %v310, %v958
    %v960 = vpop.f32.mrb[0].mxu0
    %v961 = vadd.f32 %v310, %v960
    %v962 = vpop.f32.mrb[0].mxu0
    %v963 = vadd.f32 %v315, %v962
    %v964 = vpop.f32.mrb[0].mxu0
    %v965 = vadd.f32 %v315, %v964
    %966 = vmatprep.mubr.bf16.mxu0 0
    %967 = vmatmul.mubr.bf16.gmra.mrb[0].mxu0 %v776
    %v968 = vpop.f32.mrb[0].mxu0
    %v969 = vadd.f32 %v320, %v968
    %v970 = vpop.f32.mrb[0].mxu0
    %v971 = vadd.f32 %v320, %v970
    %v972 = vpop.f32.mrb[0].mxu0
    %v973 = vadd.f32 %v325, %v972
    %v974 = vpop.f32.mrb[0].mxu0
    %v975 = vadd.f32 %v325, %v974
    %976 = vmatprep.mubr.bf16.mxu0 0
    %977 = vmatmul.mubr.bf16.gmra.mrb[0].mxu0 %v779
    %v978 = vpop.f32.mrb[0].mxu0
    %v979 = vadd.f32 %v330, %v978
    %v980 = vpop.f32.mrb[0].mxu0
    %v981 = vadd.f32 %v330, %v980
    %v982 = vpop.f32.mrb[0].mxu0
    %v983 = vadd.f32 %v335, %v982
    %v984 = vpop.f32.mrb[0].mxu0
    %v985 = vadd.f32 %v335, %v984
    %986 = vmatprep.mubr.bf16.mxu0 0
    %987 = vmatmul.mubr.bf16.gmra.mrb[0].mxu0 %v782
    %v988 = vpop.f32.mrb[0].mxu0
    %v989 = vadd.f32 %v340, %v988
    %v990 = vpop.f32.mrb[0].mxu0
    %v991 = vadd.f32 %v340, %v990
    %v992 = vpop.f32.mrb[0].mxu0
    %v993 = vadd.f32 %v345, %v992
    %v994 = vpop.f32.mrb[0].mxu0
    %v995 = vadd.f32 %v345, %v994
    %996 = vmatprep.mubr.bf16.mxu0 0
    %997 = vmatmul.mubr.bf16.gmra.mrb[0].mxu0 %v785
    %v998 = vpop.f32.mrb[0].mxu0
    %v999 = vadd.f32 %v350, %v998
    %v1000 = vpop.f32.mrb[0].mxu0
    %v1001 = vadd.f32 %v350, %v1000
    %v1002 = vpop.f32.mrb[0].mxu0
    %v1003 = vadd.f32 %v355, %v1002
    %v1004 = vpop.f32.mrb[0].mxu0
    %v1005 = vadd.f32 %v355, %v1004
    %1006 = vmatprep.mubr.bf16.mxu0 0
    %1007 = vmatmul.mubr.bf16.gmra.mrb[0].mxu0 %v788
    %v1008 = vpop.f32.mrb[0].mxu0
    %v1009 = vadd.f32 %v360, %v1008
    %v1010 = vpop.f32.mrb[0].mxu0
    %v1011 = vadd.f32 %v360, %v1010
    %v1012 = vpop.f32.mrb[0].mxu0
    %v1013 = vadd.f32 %v365, %v1012
    %v1014 = vpop.f32.mrb[0].mxu0
    %v1015 = vadd.f32 %v365, %v1014
    %1016 = vmatprep.mubr.bf16.mxu0 0
    %1017 = vmatmul.mubr.bf16.gmra.mrb[0].mxu0 %v791
    %v1018 = vpop.f32.mrb[0].mxu0
    %v1019 = vadd.f32 %v370, %v1018
    %v1020 = vpop.f32.mrb[0].mxu0
    %v1021 = vadd.f32 %v370, %v1020
    %v1022 = vpop.f32.mrb[0].mxu0
    %v1023 = vadd.f32 %v375, %v1022
    %v1024 = vpop.f32.mrb[0].mxu0
    %v1025 = vadd.f32 %v375, %v1024
    %1026 = vmatprep.mubr.bf16.mxu0 0
    %1027 = vmatmul.mubr.bf16.gmra.mrb[0].mxu0 %v794
    %v1028 = vpop.f32.mrb[0].mxu0
    %v1029 = vadd.f32 %v380, %v1028
    %v1030 = vpop.f32.mrb[0].mxu0
    %v1031 = vadd.f32 %v380, %v1030
    %v1032 = vpop.f32.mrb[0].mxu0
    %v1033 = vadd.f32 %v385, %v1032
    %v1034 = vpop.f32.mrb[0].mxu0
    %v1035 = vadd.f32 %v385, %v1034
    %1036 = vmatprep.mubr.bf16.mxu0 0
    %1037 = vmatmul.mubr.bf16.gmra.mrb[0].mxu0 %v797
    %v1038 = vpop.f32.mrb[0].mxu0
    %v1039 = vadd.f32 %v390, %v1038
    %v1040 = vpop.f32.mrb[0].mxu0
    %v1041 = vadd.f32 %v390, %v1040
    %v1042 = vpop.f32.mrb[0].mxu0
    %v1043 = vadd.f32 %v395, %v1042
    %v1044 = vpop.f32.mrb[0].mxu0
    %v1045 = vadd.f32 %v395, %v1044
    %1046 = vmatprep.mubr.bf16.mxu0 0
    %1047 = vmatmul.mubr.bf16.gmra.mrb[0].mxu0 %v800
    %v1048 = vpop.f32.mrb[0].mxu0
    %v1049 = vadd.f32 %v400, %v1048
    %v1050 = vpop.f32.mrb[0].mxu0
    %v1051 = vadd.f32 %v400, %v1050
    %v1052 = vpop.f32.mrb[0].mxu0
    %v1053 = vadd.f32 %v405, %v1052
    %v1054 = vpop.f32.mrb[0].mxu0
    %v1055 = vadd.f32 %v405, %v1054
    %1056 = vmatprep.mubr.bf16.mxu0 0
    %1057 = vmatmul.mubr.bf16.gmra.mrb[0].mxu0 %v803
    %v1058 = vpop.f32.mrb[0].mxu0
    %v1059 = vadd.f32 %v410, %v1058
    %v1060 = vpop.f32.mrb[0].mxu0
    %v1061 = vadd.f32 %v410, %v1060
    %v1062 = vpop.f32.mrb[0].mxu0
    %v1063 = vadd.f32 %v415, %v1062
    %v1064 = vpop.f32.mrb[0].mxu0
    %v1065 = vadd.f32 %v415, %v1064
    %1066 = vmatprep.mubr.bf16.mxu0 0
    %1067 = vmatmul.mubr.bf16.gmra.mrb[0].mxu0 %v806
    %v1068 = vpop.f32.mrb[0].mxu0
    %v1069 = vadd.f32 %v420, %v1068
    %v1070 = vpop.f32.mrb[0].mxu0
    %v1071 = vadd.f32 %v420, %v1070
    %v1072 = vpop.f32.mrb[0].mxu0
    %v1073 = vadd.f32 %v425, %v1072
    %v1074 = vpop.f32.mrb[0].mxu0
    %v1075 = vadd.f32 %v425, %v1074
    %1076 = vmatprep.mubr.bf16.mxu0 0
    %1077 = vmatmul.mubr.bf16.gmra.mrb[0].mxu0 %v809
    %v1078 = vpop.f32.mrb[0].mxu0
    %v1079 = vadd.f32 %v430, %v1078
    %v1080 = vpop.f32.mrb[0].mxu0
    %v1081 = vadd.f32 %v430, %v1080
    %v1082 = vpop.f32.mrb[0].mxu0
    %v1083 = vadd.f32 %v435, %v1082
    %v1084 = vpop.f32.mrb[0].mxu0
    %v1085 = vadd.f32 %v435, %v1084
    %1086 = vmatprep.mubr.bf16.mxu0 0
    %1087 = vmatmul.mubr.bf16.gmra.mrb[0].mxu0 %v812
    %v1088 = vpop.f32.mrb[0].mxu0
    %v1089 = vadd.f32 %v440, %v1088
    %v1090 = vpop.f32.mrb[0].mxu0
    %v1091 = vadd.f32 %v440, %v1090
    %v1092 = vpop.f32.mrb[0].mxu0
    %v1093 = vadd.f32 %v445, %v1092
    %v1094 = vpop.f32.mrb[0].mxu0
    %v1095 = vadd.f32 %v445, %v1094
    %1096 = vmatprep.mubr.bf16.mxu0 0
    %1097 = vmatmul.mubr.bf16.gmra.mrb[0].mxu0 %v815
    %v1098 = vpop.f32.mrb[0].mxu0
    %v1099 = vadd.f32 %v450, %v1098
    %v1100 = vpop.f32.mrb[0].mxu0
    %v1101 = vadd.f32 %v450, %v1100
    %v1102 = vpop.f32.mrb[0].mxu0
    %v1103 = vadd.f32 %v455, %v1102
    %v1104 = vpop.f32.mrb[0].mxu0
    %v1105 = vadd.f32 %v455, %v1104
    %1106 = vmatprep.mubr.bf16.mxu0 0
    %1107 = vmatmul.mubr.bf16.gmra.mrb[0].mxu0 %v818
    %v1108 = vpop.f32.mrb[0].mxu0
    %v1109 = vadd.f32 %v460, %v1108
    %v1110 = vpop.f32.mrb[0].mxu0
    %v1111 = vadd.f32 %v460, %v1110
    %v1112 = vpop.f32.mrb[0].mxu0
    %v1113 = vadd.f32 %v465, %v1112
    %v1114 = vpop.f32.mrb[0].mxu0
    %v1115 = vadd.f32 %v465, %v1114
    %1116 = vmatprep.mubr.bf16.mxu0 0
    %1117 = vmatmul.mubr.bf16.gmra.mrb[0].mxu0 %v821
    %v1118 = vpop.f32.mrb[0].mxu0
    %v1119 = vadd.f32 %v470, %v1118
    %v1120 = vpop.f32.mrb[0].mxu0
    %v1121 = vadd.f32 %v470, %v1120
    %v1122 = vpop.f32.mrb[0].mxu0
    %v1123 = vadd.f32 %v475, %v1122
    %v1124 = vpop.f32.mrb[0].mxu0
    %v1125 = vadd.f32 %v475, %v1124
    %1126 = vmatprep.mubr.bf16.mxu0 0
    %1127 = vmatmul.mubr.bf16.gmra.mrb[0].mxu0 %v824
    %v1128 = vpop.f32.mrb[0].mxu0
    %v1129 = vadd.f32 %v480, %v1128
    %v1130 = vpop.f32.mrb[0].mxu0
    %v1131 = vadd.f32 %v480, %v1130
    %v1132 = vpop.f32.mrb[0].mxu0
    %v1133 = vadd.f32 %v485, %v1132
    %v1134 = vpop.f32.mrb[0].mxu0
    %v1135 = vadd.f32 %v485, %v1134
    %1136 = vmatprep.mubr.bf16.mxu0 0
    %1137 = vmatmul.mubr.bf16.gmra.mrb[0].mxu0 %v827
    %v1138 = vpop.f32.mrb[0].mxu0
    %v1139 = vadd.f32 %v490, %v1138
    %v1140 = vpop.f32.mrb[0].mxu0
    %v1141 = vadd.f32 %v490, %v1140
    %v1142 = vpop.f32.mrb[0].mxu0
    %v1143 = vadd.f32 %v495, %v1142
    %v1144 = vpop.f32.mrb[0].mxu0
    %v1145 = vadd.f32 %v495, %v1144
    %1146 = vmatprep.mubr.bf16.mxu0 0
    %1147 = vmatmul.mubr.bf16.gmra.mrb[0].mxu0 %v830
    %v1148 = vpop.f32.mrb[0].mxu0
    %v1149 = vadd.f32 %v500, %v1148
    %v1150 = vpop.f32.mrb[0].mxu0
    %v1151 = vadd.f32 %v500, %v1150
    %v1152 = vpop.f32.mrb[0].mxu0
    %v1153 = vadd.f32 %v505, %v1152
    %v1154 = vpop.f32.mrb[0].mxu0
    %v1155 = vadd.f32 %v505, %v1154
    %1156 = vmatprep.mubr.bf16.mxu0 0
    %1157 = vmatmul.mubr.bf16.gmra.mrb[0].mxu0 %v833
    %v1158 = vpop.f32.mrb[0].mxu0
    %v1159 = vadd.f32 %v510, %v1158
    %v1160 = vpop.f32.mrb[0].mxu0
    %v1161 = vadd.f32 %v510, %v1160
    %v1162 = vpop.f32.mrb[0].mxu0
    %v1163 = vadd.f32 %v515, %v1162
    %v1164 = vpop.f32.mrb[0].mxu0
    %v1165 = vadd.f32 %v515, %v1164
    %1166 = vmatprep.mubr.bf16.mxu0 0
    %1167 = vmatmul.mubr.bf16.gmra.mrb[0].mxu0 %v836
    %v1168 = vpop.f32.mrb[0].mxu0
    %v1169 = vadd.f32 %v520, %v1168
    %v1170 = vpop.f32.mrb[0].mxu0
    %v1171 = vadd.f32 %v520, %v1170
    %v1172 = vpop.f32.mrb[0].mxu0
    %v1173 = vadd.f32 %v525, %v1172
    %v1174 = vpop.f32.mrb[0].mxu0
    %v1175 = vadd.f32 %v525, %v1174
    %1176 = vmatprep.mubr.bf16.mxu0 0
    %1177 = vmatmul.mubr.bf16.gmra.mrb[0].mxu0 %v839
    %v1178 = vpop.f32.mrb[0].mxu0
    %v1179 = vadd.f32 %v530, %v1178
    %v1180 = vpop.f32.mrb[0].mxu0
    %v1181 = vadd.f32 %v530, %v1180
    %v1182 = vpop.f32.mrb[0].mxu0
    %v1183 = vadd.f32 %v535, %v1182
    %v1184 = vpop.f32.mrb[0].mxu0
    %v1185 = vadd.f32 %v535, %v1184
    %1186 = vmatprep.mubr.bf16.mxu0 0
    %1187 = vmatmul.mubr.bf16.gmra.mrb[0].mxu0 %v842
    %v1188 = vpop.f32.mrb[0].mxu0
    %v1189 = vadd.f32 %v540, %v1188
    %v1190 = vpop.f32.mrb[0].mxu0
    %v1191 = vadd.f32 %v540, %v1190
    %v1192 = vpop.f32.mrb[0].mxu0
    %v1193 = vadd.f32 %v545, %v1192
    %v1194 = vpop.f32.mrb[0].mxu0
    %v1195 = vadd.f32 %v545, %v1194
    %1196 = vdwg.mxu0
    %1197 = vmatprep.subr.bf16.mxu0 %v734
    %1198 = vmatpush1.bf16.msra.mxu0 %v733
    %1199 = vmatprep.subr.bf16.mxu0 %v738
    %1200 = vmatpush1.bf16.msra.mxu0 %v737
    %1201 = vmatprep.subr.bf16.mxu0 0
    %1202 = vmatpush1.bf16.msra.mxu0 0
    %1203 = vmatprep.subr.bf16.mxu0 0
    %1204 = vmatpush1.bf16.msra.mxu0 0
    %1205 = vmatprep.subr.bf16.mxu0 0
    %1206 = vmatpush1.bf16.msra.mxu0 0
    %1207 = vmatprep.subr.bf16.mxu0 0
    %1208 = vmatpush1.bf16.msra.mxu0 0
    %1209 = vmatprep.subr.bf16.mxu0 0
    %1210 = vmatpush1.bf16.msra.mxu0 0
    %1211 = vmatprep.subr.bf16.mxu0 0
    %1212 = vmatpush1.bf16.msra.mxu0 0
    %1213 = vmatprep.subr.bf16.mxu0 0
    %1214 = vmatpush1.bf16.msra.mxu0 0
    %1215 = vmatprep.subr.bf16.mxu0 0
    %1216 = vmatpush1.bf16.msra.mxu0 0
    %1217 = vmatprep.subr.bf16.mxu0 0
    %1218 = vmatpush1.bf16.msra.mxu0 0
    %1219 = vmatprep.subr.bf16.mxu0 0
    %1220 = vmatpush1.bf16.msra.mxu0 0
    %1221 = vmatprep.subr.bf16.mxu0 0
    %1222 = vmatpush1.bf16.msra.mxu0 0
    %1223 = vmatprep.subr.bf16.mxu0 0
    %1224 = vmatpush1.bf16.msra.mxu0 0
    %1225 = vmatprep.subr.bf16.mxu0 0
    %1226 = vmatpush1.bf16.msra.mxu0 0
    %1227 = vmatprep.subr.bf16.mxu0 0
    %1228 = vmatpush1.bf16.msra.mxu0 0
    %1229 = vmatprep.mubr.bf16.mxu0 0
    %1230 = vmatmul.mubr.bf16.gmra.mrb[0].mxu0 %v749
    %v1231 = vpop.f32.mrb[0].mxu0
    %v1232 = vadd.f32 %v230, %v1231
    %v1233 = vpop.f32.mrb[0].mxu0
    %v1234 = vadd.f32 %v230, %v1233
    %v1235 = vpop.f32.mrb[0].mxu0
    %v1236 = vadd.f32 %v235, %v1235
    %v1237 = vpop.f32.mrb[0].mxu0
    %v1238 = vadd.f32 %v235, %v1237
    %1239 = vmatprep.mubr.bf16.mxu0 0
    %1240 = vmatmul.mubr.bf16.gmra.mrb[0].mxu0 %v752
    %v1241 = vpop.f32.mrb[0].mxu0
    %v1242 = vadd.f32 %v240, %v1241
    %v1243 = vpop.f32.mrb[0].mxu0
    %v1244 = vadd.f32 %v240, %v1243
    %v1245 = vpop.f32.mrb[0].mxu0
    %v1246 = vadd.f32 %v245, %v1245
    %v1247 = vpop.f32.mrb[0].mxu0
    %v1248 = vadd.f32 %v245, %v1247
    %1249 = vmatprep.mubr.bf16.mxu0 0
    %1250 = vmatmul.mubr.bf16.gmra.mrb[0].mxu0 %v755
    %v1251 = vpop.f32.mrb[0].mxu0
    %v1252 = vadd.f32 %v250, %v1251
    %v1253 = vpop.f32.mrb[0].mxu0
    %v1254 = vadd.f32 %v250, %v1253
    %v1255 = vpop.f32.mrb[0].mxu0
    %v1256 = vadd.f32 %v255, %v1255
    %v1257 = vpop.f32.mrb[0].mxu0
    %v1258 = vadd.f32 %v255, %v1257
    %1259 = vmatprep.mubr.bf16.mxu0 0
    %1260 = vmatmul.mubr.bf16.gmra.mrb[0].mxu0 %v758
    %v1261 = vpop.f32.mrb[0].mxu0
    %v1262 = vadd.f32 %v260, %v1261
    %v1263 = vpop.f32.mrb[0].mxu0
    %v1264 = vadd.f32 %v260, %v1263
    %v1265 = vpop.f32.mrb[0].mxu0
    %v1266 = vadd.f32 %v265, %v1265
    %v1267 = vpop.f32.mrb[0].mxu0
    %v1268 = vadd.f32 %v265, %v1267
    %1269 = vmatprep.mubr.bf16.mxu0 0
    %1270 = vmatmul.mubr.bf16.gmra.mrb[0].mxu0 %v761
    %v1271 = vpop.f32.mrb[0].mxu0
    %v1272 = vadd.f32 %v270, %v1271
    %v1273 = vpop.f32.mrb[0].mxu0
    %v1274 = vadd.f32 %v270, %v1273
    %v1275 = vpop.f32.mrb[0].mxu0
    %v1276 = vadd.f32 %v275, %v1275
    %v1277 = vpop.f32.mrb[0].mxu0
    %v1278 = vadd.f32 %v275, %v1277
    %1279 = vmatprep.mubr.bf16.mxu0 0
    %1280 = vmatmul.mubr.bf16.gmra.mrb[0].mxu0 %v764
    %v1281 = vpop.f32.mrb[0].mxu0
    %v1282 = vadd.f32 %v280, %v1281
    %v1283 = vpop.f32.mrb[0].mxu0
    %v1284 = vadd.f32 %v280, %v1283
    %v1285 = vpop.f32.mrb[0].mxu0
    %v1286 = vadd.f32 %v285, %v1285
    %v1287 = vpop.f32.mrb[0].mxu0
    %v1288 = vadd.f32 %v285, %v1287
    %1289 = vmatprep.mubr.bf16.mxu0 0
    %1290 = vmatmul.mubr.bf16.gmra.mrb[0].mxu0 %v767
    %v1291 = vpop.f32.mrb[0].mxu0
    %v1292 = vadd.f32 %v290, %v1291
    %v1293 = vpop.f32.mrb[0].mxu0
    %v1294 = vadd.f32 %v290, %v1293
    %v1295 = vpop.f32.mrb[0].mxu0
    %v1296 = vadd.f32 %v295, %v1295
    %v1297 = vpop.f32.mrb[0].mxu0
    %v1298 = vadd.f32 %v295, %v1297
    %1299 = vmatprep.mubr.bf16.mxu0 0
    %1300 = vmatmul.mubr.bf16.gmra.mrb[0].mxu0 %v770
    %v1301 = vpop.f32.mrb[0].mxu0
    %v1302 = vadd.f32 %v300, %v1301
    %v1303 = vpop.f32.mrb[0].mxu0
    %v1304 = vadd.f32 %v300, %v1303
    %v1305 = vpop.f32.mrb[0].mxu0
    %v1306 = vadd.f32 %v305, %v1305
    %v1307 = vpop.f32.mrb[0].mxu0
    %v1308 = vadd.f32 %v305, %v1307
    %1309 = vmatprep.mubr.bf16.mxu0 0
    %1310 = vmatmul.mubr.bf16.gmra.mrb[0].mxu0 %v773
    %v1311 = vpop.f32.mrb[0].mxu0
    %v1312 = vadd.f32 %v310, %v1311
    %v1313 = vpop.f32.mrb[0].mxu0
    %v1314 = vadd.f32 %v310, %v1313
    %v1315 = vpop.f32.mrb[0].mxu0
    %v1316 = vadd.f32 %v315, %v1315
    %v1317 = vpop.f32.mrb[0].mxu0
    %v1318 = vadd.f32 %v315, %v1317
    %1319 = vmatprep.mubr.bf16.mxu0 0
    %1320 = vmatmul.mubr.bf16.gmra.mrb[0].mxu0 %v776
    %v1321 = vpop.f32.mrb[0].mxu0
    %v1322 = vadd.f32 %v320, %v1321
    %v1323 = vpop.f32.mrb[0].mxu0
    %v1324 = vadd.f32 %v320, %v1323
    %v1325 = vpop.f32.mrb[0].mxu0
    %v1326 = vadd.f32 %v325, %v1325
    %v1327 = vpop.f32.mrb[0].mxu0
    %v1328 = vadd.f32 %v325, %v1327
    %1329 = vmatprep.mubr.bf16.mxu0 0
    %1330 = vmatmul.mubr.bf16.gmra.mrb[0].mxu0 %v779
    %v1331 = vpop.f32.mrb[0].mxu0
    %v1332 = vadd.f32 %v330, %v1331
    %v1333 = vpop.f32.mrb[0].mxu0
    %v1334 = vadd.f32 %v330, %v1333
    %v1335 = vpop.f32.mrb[0].mxu0
    %v1336 = vadd.f32 %v335, %v1335
    %v1337 = vpop.f32.mrb[0].mxu0
    %v1338 = vadd.f32 %v335, %v1337
    %1339 = vmatprep.mubr.bf16.mxu0 0
    %1340 = vmatmul.mubr.bf16.gmra.mrb[0].mxu0 %v782
    %v1341 = vpop.f32.mrb[0].mxu0
    %v1342 = vadd.f32 %v340, %v1341
    %v1343 = vpop.f32.mrb[0].mxu0
    %v1344 = vadd.f32 %v340, %v1343
    %v1345 = vpop.f32.mrb[0].mxu0
    %v1346 = vadd.f32 %v345, %v1345
    %v1347 = vpop.f32.mrb[0].mxu0
    %v1348 = vadd.f32 %v345, %v1347
    %1349 = vmatprep.mubr.bf16.mxu0 0
    %1350 = vmatmul.mubr.bf16.gmra.mrb[0].mxu0 %v785
    %v1351 = vpop.f32.mrb[0].mxu0
    %v1352 = vadd.f32 %v350, %v1351
    %v1353 = vpop.f32.mrb[0].mxu0
    %v1354 = vadd.f32 %v350, %v1353
    %v1355 = vpop.f32.mrb[0].mxu0
    %v1356 = vadd.f32 %v355, %v1355
    %v1357 = vpop.f32.mrb[0].mxu0
    %v1358 = vadd.f32 %v355, %v1357
    %1359 = vmatprep.mubr.bf16.mxu0 0
    %1360 = vmatmul.mubr.bf16.gmra.mrb[0].mxu0 %v788
    %v1361 = vpop.f32.mrb[0].mxu0
    %v1362 = vadd.f32 %v360, %v1361
    %v1363 = vpop.f32.mrb[0].mxu0
    %v1364 = vadd.f32 %v360, %v1363
    %v1365 = vpop.f32.mrb[0].mxu0
    %v1366 = vadd.f32 %v365, %v1365
    %v1367 = vpop.f32.mrb[0].mxu0
    %v1368 = vadd.f32 %v365, %v1367
    %1369 = vmatprep.mubr.bf16.mxu0 0
    %1370 = vmatmul.mubr.bf16.gmra.mrb[0].mxu0 %v791
    %v1371 = vpop.f32.mrb[0].mxu0
    %v1372 = vadd.f32 %v370, %v1371
    %v1373 = vpop.f32.mrb[0].mxu0
    %v1374 = vadd.f32 %v370, %v1373
    %v1375 = vpop.f32.mrb[0].mxu0
    %v1376 = vadd.f32 %v375, %v1375
    %v1377 = vpop.f32.mrb[0].mxu0
    %v1378 = vadd.f32 %v375, %v1377
    %1379 = vmatprep.mubr.bf16.mxu0 0
    %1380 = vmatmul.mubr.bf16.gmra.mrb[0].mxu0 %v794
    %v1381 = vpop.f32.mrb[0].mxu0
    %v1382 = vadd.f32 %v380, %v1381
    %v1383 = vpop.f32.mrb[0].mxu0
    %v1384 = vadd.f32 %v380, %v1383
    %v1385 = vpop.f32.mrb[0].mxu0
    %v1386 = vadd.f32 %v385, %v1385
    %v1387 = vpop.f32.mrb[0].mxu0
    %v1388 = vadd.f32 %v385, %v1387
    %1389 = vmatprep.mubr.bf16.mxu0 0
    %1390 = vmatmul.mubr.bf16.gmra.mrb[0].mxu0 %v797
    %v1391 = vpop.f32.mrb[0].mxu0
    %v1392 = vadd.f32 %v390, %v1391
    %v1393 = vpop.f32.mrb[0].mxu0
    %v1394 = vadd.f32 %v390, %v1393
    %v1395 = vpop.f32.mrb[0].mxu0
    %v1396 = vadd.f32 %v395, %v1395
    %v1397 = vpop.f32.mrb[0].mxu0
    %v1398 = vadd.f32 %v395, %v1397
    %1399 = vmatprep.mubr.bf16.mxu0 0
    %1400 = vmatmul.mubr.bf16.gmra.mrb[0].mxu0 %v800
    %v1401 = vpop.f32.mrb[0].mxu0
    %v1402 = vadd.f32 %v400, %v1401
    %v1403 = vpop.f32.mrb[0].mxu0
    %v1404 = vadd.f32 %v400, %v1403
    %v1405 = vpop.f32.mrb[0].mxu0
    %v1406 = vadd.f32 %v405, %v1405
    %v1407 = vpop.f32.mrb[0].mxu0
    %v1408 = vadd.f32 %v405, %v1407
    %1409 = vmatprep.mubr.bf16.mxu0 0
    %1410 = vmatmul.mubr.bf16.gmra.mrb[0].mxu0 %v803
    %v1411 = vpop.f32.mrb[0].mxu0
    %v1412 = vadd.f32 %v410, %v1411
    %v1413 = vpop.f32.mrb[0].mxu0
    %v1414 = vadd.f32 %v410, %v1413
    %v1415 = vpop.f32.mrb[0].mxu0
    %v1416 = vadd.f32 %v415, %v1415
    %v1417 = vpop.f32.mrb[0].mxu0
    %v1418 = vadd.f32 %v415, %v1417
    %1419 = vmatprep.mubr.bf16.mxu0 0
    %1420 = vmatmul.mubr.bf16.gmra.mrb[0].mxu0 %v806
    %v1421 = vpop.f32.mrb[0].mxu0
    %v1422 = vadd.f32 %v420, %v1421
    %v1423 = vpop.f32.mrb[0].mxu0
    %v1424 = vadd.f32 %v420, %v1423
    %v1425 = vpop.f32.mrb[0].mxu0
    %v1426 = vadd.f32 %v425, %v1425
    %v1427 = vpop.f32.mrb[0].mxu0
    %v1428 = vadd.f32 %v425, %v1427
    %1429 = vmatprep.mubr.bf16.mxu0 0
    %1430 = vmatmul.mubr.bf16.gmra.mrb[0].mxu0 %v809
    %v1431 = vpop.f32.mrb[0].mxu0
    %v1432 = vadd.f32 %v430, %v1431
    %v1433 = vpop.f32.mrb[0].mxu0
    %v1434 = vadd.f32 %v430, %v1433
    %v1435 = vpop.f32.mrb[0].mxu0
    %v1436 = vadd.f32 %v435, %v1435
    %v1437 = vpop.f32.mrb[0].mxu0
    %v1438 = vadd.f32 %v435, %v1437
    %1439 = vmatprep.mubr.bf16.mxu0 0
    %1440 = vmatmul.mubr.bf16.gmra.mrb[0].mxu0 %v812
    %v1441 = vpop.f32.mrb[0].mxu0
    %v1442 = vadd.f32 %v440, %v1441
    %v1443 = vpop.f32.mrb[0].mxu0
    %v1444 = vadd.f32 %v440, %v1443
    %v1445 = vpop.f32.mrb[0].mxu0
    %v1446 = vadd.f32 %v445, %v1445
    %v1447 = vpop.f32.mrb[0].mxu0
    %v1448 = vadd.f32 %v445, %v1447
    %1449 = vmatprep.mubr.bf16.mxu0 0
    %1450 = vmatmul.mubr.bf16.gmra.mrb[0].mxu0 %v815
    %v1451 = vpop.f32.mrb[0].mxu0
    %v1452 = vadd.f32 %v450, %v1451
    %v1453 = vpop.f32.mrb[0].mxu0
    %v1454 = vadd.f32 %v450, %v1453
    %v1455 = vpop.f32.mrb[0].mxu0
    %v1456 = vadd.f32 %v455, %v1455
    %v1457 = vpop.f32.mrb[0].mxu0
    %v1458 = vadd.f32 %v455, %v1457
    %1459 = vmatprep.mubr.bf16.mxu0 0
    %1460 = vmatmul.mubr.bf16.gmra.mrb[0].mxu0 %v818
    %v1461 = vpop.f32.mrb[0].mxu0
    %v1462 = vadd.f32 %v460, %v1461
    %v1463 = vpop.f32.mrb[0].mxu0
    %v1464 = vadd.f32 %v460, %v1463
    %v1465 = vpop.f32.mrb[0].mxu0
    %v1466 = vadd.f32 %v465, %v1465
    %v1467 = vpop.f32.mrb[0].mxu0
    %v1468 = vadd.f32 %v465, %v1467
    %1469 = vmatprep.mubr.bf16.mxu0 0
    %1470 = vmatmul.mubr.bf16.gmra.mrb[0].mxu0 %v821
    %v1471 = vpop.f32.mrb[0].mxu0
    %v1472 = vadd.f32 %v470, %v1471
    %v1473 = vpop.f32.mrb[0].mxu0
    %v1474 = vadd.f32 %v470, %v1473
    %v1475 = vpop.f32.mrb[0].mxu0
    %v1476 = vadd.f32 %v475, %v1475
    %v1477 = vpop.f32.mrb[0].mxu0
    %v1478 = vadd.f32 %v475, %v1477
    %1479 = vmatprep.mubr.bf16.mxu0 0
    %1480 = vmatmul.mubr.bf16.gmra.mrb[0].mxu0 %v824
    %v1481 = vpop.f32.mrb[0].mxu0
    %v1482 = vadd.f32 %v480, %v1481
    %v1483 = vpop.f32.mrb[0].mxu0
    %v1484 = vadd.f32 %v480, %v1483
    %v1485 = vpop.f32.mrb[0].mxu0
    %v1486 = vadd.f32 %v485, %v1485
    %v1487 = vpop.f32.mrb[0].mxu0
    %v1488 = vadd.f32 %v485, %v1487
    %1489 = vmatprep.mubr.bf16.mxu0 0
    %1490 = vmatmul.mubr.bf16.gmra.mrb[0].mxu0 %v827
    %v1491 = vpop.f32.mrb[0].mxu0
    %v1492 = vadd.f32 %v490, %v1491
    %v1493 = vpop.f32.mrb[0].mxu0
    %v1494 = vadd.f32 %v490, %v1493
    %v1495 = vpop.f32.mrb[0].mxu0
    %v1496 = vadd.f32 %v495, %v1495
    %v1497 = vpop.f32.mrb[0].mxu0
    %v1498 = vadd.f32 %v495, %v1497
    %1499 = vmatprep.mubr.bf16.mxu0 0
    %1500 = vmatmul.mubr.bf16.gmra.mrb[0].mxu0 %v830
    %v1501 = vpop.f32.mrb[0].mxu0
    %v1502 = vadd.f32 %v500, %v1501
    %v1503 = vpop.f32.mrb[0].mxu0
    %v1504 = vadd.f32 %v500, %v1503
    %v1505 = vpop.f32.mrb[0].mxu0
    %v1506 = vadd.f32 %v505, %v1505
    %v1507 = vpop.f32.mrb[0].mxu0
    %v1508 = vadd.f32 %v505, %v1507
    %1509 = vmatprep.mubr.bf16.mxu0 0
    %1510 = vmatmul.mubr.bf16.gmra.mrb[0].mxu0 %v833
    %v1511 = vpop.f32.mrb[0].mxu0
    %v1512 = vadd.f32 %v510, %v1511
    %v1513 = vpop.f32.mrb[0].mxu0
    %v1514 = vadd.f32 %v510, %v1513
    %v1515 = vpop.f32.mrb[0].mxu0
    %v1516 = vadd.f32 %v515, %v1515
    %v1517 = vpop.f32.mrb[0].mxu0
    %v1518 = vadd.f32 %v515, %v1517
    %1519 = vmatprep.mubr.bf16.mxu0 0
    %1520 = vmatmul.mubr.bf16.gmra.mrb[0].mxu0 %v836
    %v1521 = vpop.f32.mrb[0].mxu0
    %v1522 = vadd.f32 %v520, %v1521
    %v1523 = vpop.f32.mrb[0].mxu0
    %v1524 = vadd.f32 %v520, %v1523
    %v1525 = vpop.f32.mrb[0].mxu0
    %v1526 = vadd.f32 %v525, %v1525
    %v1527 = vpop.f32.mrb[0].mxu0
    %v1528 = vadd.f32 %v525, %v1527
    %1529 = vmatprep.mubr.bf16.mxu0 0
    %1530 = vmatmul.mubr.bf16.gmra.mrb[0].mxu0 %v839
    %v1531 = vpop.f32.mrb[0].mxu0
    %v1532 = vadd.f32 %v530, %v1531
    %v1533 = vpop.f32.mrb[0].mxu0
    %v1534 = vadd.f32 %v530, %v1533
    %v1535 = vpop.f32.mrb[0].mxu0
    %v1536 = vadd.f32 %v535, %v1535
    %v1537 = vpop.f32.mrb[0].mxu0
    %v1538 = vadd.f32 %v535, %v1537
    %1539 = vmatprep.mubr.bf16.mxu0 0
    %1540 = vmatmul.mubr.bf16.gmra.mrb[0].mxu0 %v842
    %v1541 = vpop.f32.mrb[0].mxu0
    %v1542 = vadd.f32 %v540, %v1541
    %v1543 = vpop.f32.mrb[0].mxu0
    %v1544 = vadd.f32 %v540, %v1543
    %v1545 = vpop.f32.mrb[0].mxu0
    %v1546 = vadd.f32 %v545, %v1545
    %v1547 = vpop.f32.mrb[0].mxu0
    %v1548 = vadd.f32 %v545, %v1547
    %1549 = vdwg.mxu0
    %s1550 = sld [smem:[#allocation2]]
    %vm1551 = vcmp.ge.f32.partialorder %v879, 0.0
    %vm1552 = vcmp.ge.f32.partialorder %v881, 0.0
    %vm1553 = vcmp.ge.f32.partialorder %v1232, 0.0
    %vm1554 = vcmp.ge.f32.partialorder %v1234, 0.0
    %vm1555 = vcmp.ge.f32.partialorder %v883, 0.0
    %vm1556 = vcmp.ge.f32.partialorder %v885, 0.0
    %vm1557 = vcmp.ge.f32.partialorder %v1236, 0.0
    %vm1558 = vcmp.ge.f32.partialorder %v1238, 0.0
    %vm1559 = vcmp.ge.f32.partialorder %v889, 0.0
    %vm1560 = vcmp.ge.f32.partialorder %v891, 0.0
    %vm1561 = vcmp.ge.f32.partialorder %v1242, 0.0
    %vm1562 = vcmp.ge.f32.partialorder %v1244, 0.0
    %vm1563 = vcmp.ge.f32.partialorder %v893, 0.0
    %vm1564 = vcmp.ge.f32.partialorder %v895, 0.0
    %vm1565 = vcmp.ge.f32.partialorder %v1246, 0.0
    %vm1566 = vcmp.ge.f32.partialorder %v1248, 0.0
    %vm1567 = vcmp.ge.f32.partialorder %v899, 0.0
    %vm1568 = vcmp.ge.f32.partialorder %v901, 0.0
    %vm1569 = vcmp.ge.f32.partialorder %v1252, 0.0
    %vm1570 = vcmp.ge.f32.partialorder %v1254, 0.0
    %vm1571 = vcmp.ge.f32.partialorder %v903, 0.0
    %vm1572 = vcmp.ge.f32.partialorder %v905, 0.0
    %vm1573 = vcmp.ge.f32.partialorder %v1256, 0.0
    %vm1574 = vcmp.ge.f32.partialorder %v1258, 0.0
    %vm1575 = vcmp.ge.f32.partialorder %v909, 0.0
    %vm1576 = vcmp.ge.f32.partialorder %v911, 0.0
    %vm1577 = vcmp.ge.f32.partialorder %v1262, 0.0
    %vm1578 = vcmp.ge.f32.partialorder %v1264, 0.0
    %vm1579 = vcmp.ge.f32.partialorder %v913, 0.0
    %vm1580 = vcmp.ge.f32.partialorder %v915, 0.0
    %vm1581 = vcmp.ge.f32.partialorder %v1266, 0.0
    %vm1582 = vcmp.ge.f32.partialorder %v1268, 0.0
    %vm1583 = vcmp.ge.f32.partialorder %v919, 0.0
    %vm1584 = vcmp.ge.f32.partialorder %v921, 0.0
    %vm1585 = vcmp.ge.f32.partialorder %v1272, 0.0
    %vm1586 = vcmp.ge.f32.partialorder %v1274, 0.0
    %vm1587 = vcmp.ge.f32.partialorder %v923, 0.0
    %vm1588 = vcmp.ge.f32.partialorder %v925, 0.0
    %vm1589 = vcmp.ge.f32.partialorder %v1276, 0.0
    %vm1590 = vcmp.ge.f32.partialorder %v1278, 0.0
    %vm1591 = vcmp.ge.f32.partialorder %v929, 0.0
    %vm1592 = vcmp.ge.f32.partialorder %v931, 0.0
    %vm1593 = vcmp.ge.f32.partialorder %v1282, 0.0
    %vm1594 = vcmp.ge.f32.partialorder %v1284, 0.0
    %vm1595 = vcmp.ge.f32.partialorder %v933, 0.0
    %vm1596 = vcmp.ge.f32.partialorder %v935, 0.0
    %vm1597 = vcmp.ge.f32.partialorder %v1286, 0.0
    %vm1598 = vcmp.ge.f32.partialorder %v1288, 0.0
    %vm1599 = vcmp.ge.f32.partialorder %v939, 0.0
    %vm1600 = vcmp.ge.f32.partialorder %v941, 0.0
    %vm1601 = vcmp.ge.f32.partialorder %v1292, 0.0
    %vm1602 = vcmp.ge.f32.partialorder %v1294, 0.0
    %vm1603 = vcmp.ge.f32.partialorder %v943, 0.0
    %vm1604 = vcmp.ge.f32.partialorder %v945, 0.0
    %vm1605 = vcmp.ge.f32.partialorder %v1296, 0.0
    %vm1606 = vcmp.ge.f32.partialorder %v1298, 0.0
    %vm1607 = vcmp.ge.f32.partialorder %v949, 0.0
    %vm1608 = vcmp.ge.f32.partialorder %v951, 0.0
    %vm1609 = vcmp.ge.f32.partialorder %v1302, 0.0
    %vm1610 = vcmp.ge.f32.partialorder %v1304, 0.0
    %vm1611 = vcmp.ge.f32.partialorder %v953, 0.0
    %vm1612 = vcmp.ge.f32.partialorder %v955, 0.0
    %vm1613 = vcmp.ge.f32.partialorder %v1306, 0.0
    %vm1614 = vcmp.ge.f32.partialorder %v1308, 0.0
    %vm1615 = vcmp.ge.f32.partialorder %v959, 0.0
    %vm1616 = vcmp.ge.f32.partialorder %v961, 0.0
    %vm1617 = vcmp.ge.f32.partialorder %v1312, 0.0
    %vm1618 = vcmp.ge.f32.partialorder %v1314, 0.0
    %vm1619 = vcmp.ge.f32.partialorder %v963, 0.0
    %vm1620 = vcmp.ge.f32.partialorder %v965, 0.0
    %vm1621 = vcmp.ge.f32.partialorder %v1316, 0.0
    %vm1622 = vcmp.ge.f32.partialorder %v1318, 0.0
    %vm1623 = vcmp.ge.f32.partialorder %v969, 0.0
    %vm1624 = vcmp.ge.f32.partialorder %v971, 0.0
    %vm1625 = vcmp.ge.f32.partialorder %v1322, 0.0
    %vm1626 = vcmp.ge.f32.partialorder %v1324, 0.0
    %vm1627 = vcmp.ge.f32.partialorder %v973, 0.0
    %vm1628 = vcmp.ge.f32.partialorder %v975, 0.0
    %vm1629 = vcmp.ge.f32.partialorder %v1326, 0.0
    %vm1630 = vcmp.ge.f32.partialorder %v1328, 0.0
    %vm1631 = vcmp.ge.f32.partialorder %v979, 0.0
    %vm1632 = vcmp.ge.f32.partialorder %v981, 0.0
    %vm1633 = vcmp.ge.f32.partialorder %v1332, 0.0
    %vm1634 = vcmp.ge.f32.partialorder %v1334, 0.0
    %vm1635 = vcmp.ge.f32.partialorder %v983, 0.0
    %vm1636 = vcmp.ge.f32.partialorder %v985, 0.0
    %vm1637 = vcmp.ge.f32.partialorder %v1336, 0.0
    %vm1638 = vcmp.ge.f32.partialorder %v1338, 0.0
    %vm1639 = vcmp.ge.f32.partialorder %v989, 0.0
    %vm1640 = vcmp.ge.f32.partialorder %v991, 0.0
    %vm1641 = vcmp.ge.f32.partialorder %v1342, 0.0
    %vm1642 = vcmp.ge.f32.partialorder %v1344, 0.0
    %vm1643 = vcmp.ge.f32.partialorder %v993, 0.0
    %vm1644 = vcmp.ge.f32.partialorder %v995, 0.0
    %vm1645 = vcmp.ge.f32.partialorder %v1346, 0.0
    %vm1646 = vcmp.ge.f32.partialorder %v1348, 0.0
    %vm1647 = vcmp.ge.f32.partialorder %v999, 0.0
    %vm1648 = vcmp.ge.f32.partialorder %v1001, 0.0
    %vm1649 = vcmp.ge.f32.partialorder %v1352, 0.0
    %vm1650 = vcmp.ge.f32.partialorder %v1354, 0.0
    %vm1651 = vcmp.ge.f32.partialorder %v1003, 0.0
    %vm1652 = vcmp.ge.f32.partialorder %v1005, 0.0
    %vm1653 = vcmp.ge.f32.partialorder %v1356, 0.0
    %vm1654 = vcmp.ge.f32.partialorder %v1358, 0.0
    %vm1655 = vcmp.ge.f32.partialorder %v1009, 0.0
    %vm1656 = vcmp.ge.f32.partialorder %v1011, 0.0
    %vm1657 = vcmp.ge.f32.partialorder %v1362, 0.0
    %vm1658 = vcmp.ge.f32.partialorder %v1364, 0.0
    %vm1659 = vcmp.ge.f32.partialorder %v1013, 0.0
    %vm1660 = vcmp.ge.f32.partialorder %v1015, 0.0
    %vm1661 = vcmp.ge.f32.partialorder %v1366, 0.0
    %vm1662 = vcmp.ge.f32.partialorder %v1368, 0.0
    %vm1663 = vcmp.ge.f32.partialorder %v1019, 0.0
    %vm1664 = vcmp.ge.f32.partialorder %v1021, 0.0
    %vm1665 = vcmp.ge.f32.partialorder %v1372, 0.0
    %vm1666 = vcmp.ge.f32.partialorder %v1374, 0.0
    %vm1667 = vcmp.ge.f32.partialorder %v1023, 0.0
    %vm1668 = vcmp.ge.f32.partialorder %v1025, 0.0
    %vm1669 = vcmp.ge.f32.partialorder %v1376, 0.0
    %vm1670 = vcmp.ge.f32.partialorder %v1378, 0.0
    %vm1671 = vcmp.ge.f32.partialorder %v1029, 0.0
    %vm1672 = vcmp.ge.f32.partialorder %v1031, 0.0
    %vm1673 = vcmp.ge.f32.partialorder %v1382, 0.0
    %vm1674 = vcmp.ge.f32.partialorder %v1384, 0.0
    %vm1675 = vcmp.ge.f32.partialorder %v1033, 0.0
    %vm1676 = vcmp.ge.f32.partialorder %v1035, 0.0
    %vm1677 = vcmp.ge.f32.partialorder %v1386, 0.0
    %vm1678 = vcmp.ge.f32.partialorder %v1388, 0.0
    %vm1679 = vcmp.ge.f32.partialorder %v1039, 0.0
    %vm1680 = vcmp.ge.f32.partialorder %v1041, 0.0
    %vm1681 = vcmp.ge.f32.partialorder %v1392, 0.0
    %vm1682 = vcmp.ge.f32.partialorder %v1394, 0.0
    %vm1683 = vcmp.ge.f32.partialorder %v1043, 0.0
    %vm1684 = vcmp.ge.f32.partialorder %v1045, 0.0
    %vm1685 = vcmp.ge.f32.partialorder %v1396, 0.0
    %vm1686 = vcmp.ge.f32.partialorder %v1398, 0.0
    %vm1687 = vcmp.ge.f32.partialorder %v1049, 0.0
    %vm1688 = vcmp.ge.f32.partialorder %v1051, 0.0
    %vm1689 = vcmp.ge.f32.partialorder %v1402, 0.0
    %vm1690 = vcmp.ge.f32.partialorder %v1404, 0.0
    %vm1691 = vcmp.ge.f32.partialorder %v1053, 0.0
    %vm1692 = vcmp.ge.f32.partialorder %v1055, 0.0
    %vm1693 = vcmp.ge.f32.partialorder %v1406, 0.0
    %vm1694 = vcmp.ge.f32.partialorder %v1408, 0.0
    %vm1695 = vcmp.ge.f32.partialorder %v1059, 0.0
    %vm1696 = vcmp.ge.f32.partialorder %v1061, 0.0
    %vm1697 = vcmp.ge.f32.partialorder %v1412, 0.0
    %vm1698 = vcmp.ge.f32.partialorder %v1414, 0.0
    %vm1699 = vcmp.ge.f32.partialorder %v1063, 0.0
    %vm1700 = vcmp.ge.f32.partialorder %v1065, 0.0
    %vm1701 = vcmp.ge.f32.partialorder %v1416, 0.0
    %vm1702 = vcmp.ge.f32.partialorder %v1418, 0.0
    %vm1703 = vcmp.ge.f32.partialorder %v1069, 0.0
    %vm1704 = vcmp.ge.f32.partialorder %v1071, 0.0
    %vm1705 = vcmp.ge.f32.partialorder %v1422, 0.0
    %vm1706 = vcmp.ge.f32.partialorder %v1424, 0.0
    %vm1707 = vcmp.ge.f32.partialorder %v1073, 0.0
    %vm1708 = vcmp.ge.f32.partialorder %v1075, 0.0
    %vm1709 = vcmp.ge.f32.partialorder %v1426, 0.0
    %vm1710 = vcmp.ge.f32.partialorder %v1428, 0.0
    %vm1711 = vcmp.ge.f32.partialorder %v1079, 0.0
    %vm1712 = vcmp.ge.f32.partialorder %v1081, 0.0
    %vm1713 = vcmp.ge.f32.partialorder %v1432, 0.0
    %vm1714 = vcmp.ge.f32.partialorder %v1434, 0.0
    %vm1715 = vcmp.ge.f32.partialorder %v1083, 0.0
    %vm1716 = vcmp.ge.f32.partialorder %v1085, 0.0
    %vm1717 = vcmp.ge.f32.partialorder %v1436, 0.0
    %vm1718 = vcmp.ge.f32.partialorder %v1438, 0.0
    %vm1719 = vcmp.ge.f32.partialorder %v1089, 0.0
    %vm1720 = vcmp.ge.f32.partialorder %v1091, 0.0
    %vm1721 = vcmp.ge.f32.partialorder %v1442, 0.0
    %vm1722 = vcmp.ge.f32.partialorder %v1444, 0.0
    %vm1723 = vcmp.ge.f32.partialorder %v1093, 0.0
    %vm1724 = vcmp.ge.f32.partialorder %v1095, 0.0
    %vm1725 = vcmp.ge.f32.partialorder %v1446, 0.0
    %vm1726 = vcmp.ge.f32.partialorder %v1448, 0.0
    %vm1727 = vcmp.ge.f32.partialorder %v1099, 0.0
    %vm1728 = vcmp.ge.f32.partialorder %v1101, 0.0
    %vm1729 = vcmp.ge.f32.partialorder %v1452, 0.0
    %vm1730 = vcmp.ge.f32.partialorder %v1454, 0.0
    %vm1731 = vcmp.ge.f32.partialorder %v1103, 0.0
    %vm1732 = vcmp.ge.f32.partialorder %v1105, 0.0
    %vm1733 = vcmp.ge.f32.partialorder %v1456, 0.0
    %vm1734 = vcmp.ge.f32.partialorder %v1458, 0.0
    %vm1735 = vcmp.ge.f32.partialorder %v1109, 0.0
    %vm1736 = vcmp.ge.f32.partialorder %v1111, 0.0
    %vm1737 = vcmp.ge.f32.partialorder %v1462, 0.0
    %vm1738 = vcmp.ge.f32.partialorder %v1464, 0.0
    %vm1739 = vcmp.ge.f32.partialorder %v1113, 0.0
    %vm1740 = vcmp.ge.f32.partialorder %v1115, 0.0
    %vm1741 = vcmp.ge.f32.partialorder %v1466, 0.0
    %vm1742 = vcmp.ge.f32.partialorder %v1468, 0.0
    %vm1743 = vcmp.ge.f32.partialorder %v1119, 0.0
    %vm1744 = vcmp.ge.f32.partialorder %v1121, 0.0
    %vm1745 = vcmp.ge.f32.partialorder %v1472, 0.0
    %vm1746 = vcmp.ge.f32.partialorder %v1474, 0.0
    %vm1747 = vcmp.ge.f32.partialorder %v1123, 0.0
    %vm1748 = vcmp.ge.f32.partialorder %v1125, 0.0
    %vm1749 = vcmp.ge.f32.partialorder %v1476, 0.0
    %vm1750 = vcmp.ge.f32.partialorder %v1478, 0.0
    %vm1751 = vcmp.ge.f32.partialorder %v1129, 0.0
    %vm1752 = vcmp.ge.f32.partialorder %v1131, 0.0
    %vm1753 = vcmp.ge.f32.partialorder %v1482, 0.0
    %vm1754 = vcmp.ge.f32.partialorder %v1484, 0.0
    %vm1755 = vcmp.ge.f32.partialorder %v1133, 0.0
    %vm1756 = vcmp.ge.f32.partialorder %v1135, 0.0
    %vm1757 = vcmp.ge.f32.partialorder %v1486, 0.0
    %vm1758 = vcmp.ge.f32.partialorder %v1488, 0.0
    %vm1759 = vcmp.ge.f32.partialorder %v1139, 0.0
    %vm1760 = vcmp.ge.f32.partialorder %v1141, 0.0
    %vm1761 = vcmp.ge.f32.partialorder %v1492, 0.0
    %vm1762 = vcmp.ge.f32.partialorder %v1494, 0.0
    %vm1763 = vcmp.ge.f32.partialorder %v1143, 0.0
    %vm1764 = vcmp.ge.f32.partialorder %v1145, 0.0
    %vm1765 = vcmp.ge.f32.partialorder %v1496, 0.0
    %vm1766 = vcmp.ge.f32.partialorder %v1498, 0.0
    %vm1767 = vcmp.ge.f32.partialorder %v1149, 0.0
    %vm1768 = vcmp.ge.f32.partialorder %v1151, 0.0
    %vm1769 = vcmp.ge.f32.partialorder %v1502, 0.0
    %vm1770 = vcmp.ge.f32.partialorder %v1504, 0.0
    %vm1771 = vcmp.ge.f32.partialorder %v1153, 0.0
    %vm1772 = vcmp.ge.f32.partialorder %v1155, 0.0
    %vm1773 = vcmp.ge.f32.partialorder %v1506, 0.0
    %vm1774 = vcmp.ge.f32.partialorder %v1508, 0.0
    %vm1775 = vcmp.ge.f32.partialorder %v1159, 0.0
    %vm1776 = vcmp.ge.f32.partialorder %v1161, 0.0
    %vm1777 = vcmp.ge.f32.partialorder %v1512, 0.0
    %vm1778 = vcmp.ge.f32.partialorder %v1514, 0.0
    %vm1779 = vcmp.ge.f32.partialorder %v1163, 0.0
    %vm1780 = vcmp.ge.f32.partialorder %v1165, 0.0
    %vm1781 = vcmp.ge.f32.partialorder %v1516, 0.0
    %vm1782 = vcmp.ge.f32.partialorder %v1518, 0.0
    %vm1783 = vcmp.ge.f32.partialorder %v1169, 0.0
    %vm1784 = vcmp.ge.f32.partialorder %v1171, 0.0
    %vm1785 = vcmp.ge.f32.partialorder %v1522, 0.0
    %vm1786 = vcmp.ge.f32.partialorder %v1524, 0.0
    %vm1787 = vcmp.ge.f32.partialorder %v1173, 0.0
    %vm1788 = vcmp.ge.f32.partialorder %v1175, 0.0
    %vm1789 = vcmp.ge.f32.partialorder %v1526, 0.0
    %vm1790 = vcmp.ge.f32.partialorder %v1528, 0.0
    %vm1791 = vcmp.ge.f32.partialorder %v1179, 0.0
    %vm1792 = vcmp.ge.f32.partialorder %v1181, 0.0
    %vm1793 = vcmp.ge.f32.partialorder %v1532, 0.0
    %vm1794 = vcmp.ge.f32.partialorder %v1534, 0.0
    %vm1795 = vcmp.ge.f32.partialorder %v1183, 0.0
    %vm1796 = vcmp.ge.f32.partialorder %v1185, 0.0
    %vm1797 = vcmp.ge.f32.partialorder %v1536, 0.0
    %vm1798 = vcmp.ge.f32.partialorder %v1538, 0.0
    %vm1799 = vcmp.ge.f32.partialorder %v1189, 0.0
    %vm1800 = vcmp.ge.f32.partialorder %v1191, 0.0
    %vm1801 = vcmp.ge.f32.partialorder %v1542, 0.0
    %vm1802 = vcmp.ge.f32.partialorder %v1544, 0.0
    %vm1803 = vcmp.ge.f32.partialorder %v1193, 0.0
    %vm1804 = vcmp.ge.f32.partialorder %v1195, 0.0
    %vm1805 = vcmp.ge.f32.partialorder %v1546, 0.0
    %vm1806 = vcmp.ge.f32.partialorder %v1548, 0.0
    %v1807 = vstv %s1550
    %v1808 = vmul.f32 %v1807, %v879
    %v1809 = vmul.f32 %v1807, %v881
    %v1810 = vmul.f32 %v1807, %v1232
    %v1811 = vmul.f32 %v1807, %v1234
    %v1812 = vmul.f32 %v1807, %v883
    %v1813 = vmul.f32 %v1807, %v885
    %v1814 = vmul.f32 %v1807, %v1236
    %v1815 = vmul.f32 %v1807, %v1238
    %v1816 = vmul.f32 %v1807, %v889
    %v1817 = vmul.f32 %v1807, %v891
    %v1818 = vmul.f32 %v1807, %v1242
    %v1819 = vmul.f32 %v1807, %v1244
    %v1820 = vmul.f32 %v1807, %v893
    %v1821 = vmul.f32 %v1807, %v895
    %v1822 = vmul.f32 %v1807, %v1246
    %v1823 = vmul.f32 %v1807, %v1248
    %v1824 = vmul.f32 %v1807, %v899
    %v1825 = vmul.f32 %v1807, %v901
    %v1826 = vmul.f32 %v1807, %v1252
    %v1827 = vmul.f32 %v1807, %v1254
    %v1828 = vmul.f32 %v1807, %v903
    %v1829 = vmul.f32 %v1807, %v905
    %v1830 = vmul.f32 %v1807, %v1256
    %v1831 = vmul.f32 %v1807, %v1258
    %v1832 = vmul.f32 %v1807, %v909
    %v1833 = vmul.f32 %v1807, %v911
    %v1834 = vmul.f32 %v1807, %v1262
    %v1835 = vmul.f32 %v1807, %v1264
    %v1836 = vmul.f32 %v1807, %v913
    %v1837 = vmul.f32 %v1807, %v915
    %v1838 = vmul.f32 %v1807, %v1266
    %v1839 = vmul.f32 %v1807, %v1268
    %v1840 = vmul.f32 %v1807, %v919
    %v1841 = vmul.f32 %v1807, %v921
    %v1842 = vmul.f32 %v1807, %v1272
    %v1843 = vmul.f32 %v1807, %v1274
    %v1844 = vmul.f32 %v1807, %v923
    %v1845 = vmul.f32 %v1807, %v925
    %v1846 = vmul.f32 %v1807, %v1276
    %v1847 = vmul.f32 %v1807, %v1278
    %v1848 = vmul.f32 %v1807, %v929
    %v1849 = vmul.f32 %v1807, %v931
    %v1850 = vmul.f32 %v1807, %v1282
    %v1851 = vmul.f32 %v1807, %v1284
    %v1852 = vmul.f32 %v1807, %v933
    %v1853 = vmul.f32 %v1807, %v935
    %v1854 = vmul.f32 %v1807, %v1286
    %v1855 = vmul.f32 %v1807, %v1288
    %v1856 = vmul.f32 %v1807, %v939
    %v1857 = vmul.f32 %v1807, %v941
    %v1858 = vmul.f32 %v1807, %v1292
    %v1859 = vmul.f32 %v1807, %v1294
    %v1860 = vmul.f32 %v1807, %v943
    %v1861 = vmul.f32 %v1807, %v945
    %v1862 = vmul.f32 %v1807, %v1296
    %v1863 = vmul.f32 %v1807, %v1298
    %v1864 = vmul.f32 %v1807, %v949
    %v1865 = vmul.f32 %v1807, %v951
    %v1866 = vmul.f32 %v1807, %v1302
    %v1867 = vmul.f32 %v1807, %v1304
    %v1868 = vmul.f32 %v1807, %v953
    %v1869 = vmul.f32 %v1807, %v955
    %v1870 = vmul.f32 %v1807, %v1306
    %v1871 = vmul.f32 %v1807, %v1308
    %v1872 = vmul.f32 %v1807, %v959
    %v1873 = vmul.f32 %v1807, %v961
    %v1874 = vmul.f32 %v1807, %v1312
    %v1875 = vmul.f32 %v1807, %v1314
    %v1876 = vmul.f32 %v1807, %v963
    %v1877 = vmul.f32 %v1807, %v965
    %v1878 = vmul.f32 %v1807, %v1316
    %v1879 = vmul.f32 %v1807, %v1318
    %v1880 = vmul.f32 %v1807, %v969
    %v1881 = vmul.f32 %v1807, %v971
    %v1882 = vmul.f32 %v1807, %v1322
    %v1883 = vmul.f32 %v1807, %v1324
    %v1884 = vmul.f32 %v1807, %v973
    %v1885 = vmul.f32 %v1807, %v975
    %v1886 = vmul.f32 %v1807, %v1326
    %v1887 = vmul.f32 %v1807, %v1328
    %v1888 = vmul.f32 %v1807, %v979
    %v1889 = vmul.f32 %v1807, %v981
    %v1890 = vmul.f32 %v1807, %v1332
    %v1891 = vmul.f32 %v1807, %v1334
    %v1892 = vmul.f32 %v1807, %v983
    %v1893 = vmul.f32 %v1807, %v985
    %v1894 = vmul.f32 %v1807, %v1336
    %v1895 = vmul.f32 %v1807, %v1338
    %v1896 = vmul.f32 %v1807, %v989
    %v1897 = vmul.f32 %v1807, %v991
    %v1898 = vmul.f32 %v1807, %v1342
    %v1899 = vmul.f32 %v1807, %v1344
    %v1900 = vmul.f32 %v1807, %v993
    %v1901 = vmul.f32 %v1807, %v995
    %v1902 = vmul.f32 %v1807, %v1346
    %v1903 = vmul.f32 %v1807, %v1348
    %v1904 = vmul.f32 %v1807, %v999
    %v1905 = vmul.f32 %v1807, %v1001
    %v1906 = vmul.f32 %v1807, %v1352
    %v1907 = vmul.f32 %v1807, %v1354
    %v1908 = vmul.f32 %v1807, %v1003
    %v1909 = vmul.f32 %v1807, %v1005
    %v1910 = vmul.f32 %v1807, %v1356
    %v1911 = vmul.f32 %v1807, %v1358
    %v1912 = vmul.f32 %v1807, %v1009
    %v1913 = vmul.f32 %v1807, %v1011
    %v1914 = vmul.f32 %v1807, %v1362
    %v1915 = vmul.f32 %v1807, %v1364
    %v1916 = vmul.f32 %v1807, %v1013
    %v1917 = vmul.f32 %v1807, %v1015
    %v1918 = vmul.f32 %v1807, %v1366
    %v1919 = vmul.f32 %v1807, %v1368
    %v1920 = vmul.f32 %v1807, %v1019
    %v1921 = vmul.f32 %v1807, %v1021
    %v1922 = vmul.f32 %v1807, %v1372
    %v1923 = vmul.f32 %v1807, %v1374
    %v1924 = vmul.f32 %v1807, %v1023
    %v1925 = vmul.f32 %v1807, %v1025
    %v1926 = vmul.f32 %v1807, %v1376
    %v1927 = vmul.f32 %v1807, %v1378
    %v1928 = vmul.f32 %v1807, %v1029
    %v1929 = vmul.f32 %v1807, %v1031
    %v1930 = vmul.f32 %v1807, %v1382
    %v1931 = vmul.f32 %v1807, %v1384
    %v1932 = vmul.f32 %v1807, %v1033
    %v1933 = vmul.f32 %v1807, %v1035
    %v1934 = vmul.f32 %v1807, %v1386
    %v1935 = vmul.f32 %v1807, %v1388
    %v1936 = vmul.f32 %v1807, %v1039
    %v1937 = vmul.f32 %v1807, %v1041
    %v1938 = vmul.f32 %v1807, %v1392
    %v1939 = vmul.f32 %v1807, %v1394
    %v1940 = vmul.f32 %v1807, %v1043
    %v1941 = vmul.f32 %v1807, %v1045
    %v1942 = vmul.f32 %v1807, %v1396
    %v1943 = vmul.f32 %v1807, %v1398
    %v1944 = vmul.f32 %v1807, %v1049
    %v1945 = vmul.f32 %v1807, %v1051
    %v1946 = vmul.f32 %v1807, %v1402
    %v1947 = vmul.f32 %v1807, %v1404
    %v1948 = vmul.f32 %v1807, %v1053
    %v1949 = vmul.f32 %v1807, %v1055
    %v1950 = vmul.f32 %v1807, %v1406
    %v1951 = vmul.f32 %v1807, %v1408
    %v1952 = vmul.f32 %v1807, %v1059
    %v1953 = vmul.f32 %v1807, %v1061
    %v1954 = vmul.f32 %v1807, %v1412
    %v1955 = vmul.f32 %v1807, %v1414
    %v1956 = vmul.f32 %v1807, %v1063
    %v1957 = vmul.f32 %v1807, %v1065
    %v1958 = vmul.f32 %v1807, %v1416
    %v1959 = vmul.f32 %v1807, %v1418
    %v1960 = vmul.f32 %v1807, %v1069
    %v1961 = vmul.f32 %v1807, %v1071
    %v1962 = vmul.f32 %v1807, %v1422
    %v1963 = vmul.f32 %v1807, %v1424
    %v1964 = vmul.f32 %v1807, %v1073
    %v1965 = vmul.f32 %v1807, %v1075
    %v1966 = vmul.f32 %v1807, %v1426
    %v1967 = vmul.f32 %v1807, %v1428
    %v1968 = vmul.f32 %v1807, %v1079
    %v1969 = vmul.f32 %v1807, %v1081
    %v1970 = vmul.f32 %v1807, %v1432
    %v1971 = vmul.f32 %v1807, %v1434
    %v1972 = vmul.f32 %v1807, %v1083
    %v1973 = vmul.f32 %v1807, %v1085
    %v1974 = vmul.f32 %v1807, %v1436
    %v1975 = vmul.f32 %v1807, %v1438
    %v1976 = vmul.f32 %v1807, %v1089
    %v1977 = vmul.f32 %v1807, %v1091
    %v1978 = vmul.f32 %v1807, %v1442
    %v1979 = vmul.f32 %v1807, %v1444
    %v1980 = vmul.f32 %v1807, %v1093
    %v1981 = vmul.f32 %v1807, %v1095
    %v1982 = vmul.f32 %v1807, %v1446
    %v1983 = vmul.f32 %v1807, %v1448
    %v1984 = vmul.f32 %v1807, %v1099
    %v1985 = vmul.f32 %v1807, %v1101
    %v1986 = vmul.f32 %v1807, %v1452
    %v1987 = vmul.f32 %v1807, %v1454
    %v1988 = vmul.f32 %v1807, %v1103
    %v1989 = vmul.f32 %v1807, %v1105
    %v1990 = vmul.f32 %v1807, %v1456
    %v1991 = vmul.f32 %v1807, %v1458
    %v1992 = vmul.f32 %v1807, %v1109
    %v1993 = vmul.f32 %v1807, %v1111
    %v1994 = vmul.f32 %v1807, %v1462
    %v1995 = vmul.f32 %v1807, %v1464
    %v1996 = vmul.f32 %v1807, %v1113
    %v1997 = vmul.f32 %v1807, %v1115
    %v1998 = vmul.f32 %v1807, %v1466
    %v1999 = vmul.f32 %v1807, %v1468
    %v2000 = vmul.f32 %v1807, %v1119
    %v2001 = vmul.f32 %v1807, %v1121
    %v2002 = vmul.f32 %v1807, %v1472
    %v2003 = vmul.f32 %v1807, %v1474
    %v2004 = vmul.f32 %v1807, %v1123
    %v2005 = vmul.f32 %v1807, %v1125
    %v2006 = vmul.f32 %v1807, %v1476
    %v2007 = vmul.f32 %v1807, %v1478
    %v2008 = vmul.f32 %v1807, %v1129
    %v2009 = vmul.f32 %v1807, %v1131
    %v2010 = vmul.f32 %v1807, %v1482
    %v2011 = vmul.f32 %v1807, %v1484
    %v2012 = vmul.f32 %v1807, %v1133
    %v2013 = vmul.f32 %v1807, %v1135
    %v2014 = vmul.f32 %v1807, %v1486
    %v2015 = vmul.f32 %v1807, %v1488
    %v2016 = vmul.f32 %v1807, %v1139
    %v2017 = vmul.f32 %v1807, %v1141
    %v2018 = vmul.f32 %v1807, %v1492
    %v2019 = vmul.f32 %v1807, %v1494
    %v2020 = vmul.f32 %v1807, %v1143
    %v2021 = vmul.f32 %v1807, %v1145
    %v2022 = vmul.f32 %v1807, %v1496
    %v2023 = vmul.f32 %v1807, %v1498
    %v2024 = vmul.f32 %v1807, %v1149
    %v2025 = vmul.f32 %v1807, %v1151
    %v2026 = vmul.f32 %v1807, %v1502
    %v2027 = vmul.f32 %v1807, %v1504
    %v2028 = vmul.f32 %v1807, %v1153
    %v2029 = vmul.f32 %v1807, %v1155
    %v2030 = vmul.f32 %v1807, %v1506
    %v2031 = vmul.f32 %v1807, %v1508
    %v2032 = vmul.f32 %v1807, %v1159
    %v2033 = vmul.f32 %v1807, %v1161
    %v2034 = vmul.f32 %v1807, %v1512
    %v2035 = vmul.f32 %v1807, %v1514
    %v2036 = vmul.f32 %v1807, %v1163
    %v2037 = vmul.f32 %v1807, %v1165
    %v2038 = vmul.f32 %v1807, %v1516
    %v2039 = vmul.f32 %v1807, %v1518
    %v2040 = vmul.f32 %v1807, %v1169
    %v2041 = vmul.f32 %v1807, %v1171
    %v2042 = vmul.f32 %v1807, %v1522
    %v2043 = vmul.f32 %v1807, %v1524
    %v2044 = vmul.f32 %v1807, %v1173
    %v2045 = vmul.f32 %v1807, %v1175
    %v2046 = vmul.f32 %v1807, %v1526
    %v2047 = vmul.f32 %v1807, %v1528
    %v2048 = vmul.f32 %v1807, %v1179
    %v2049 = vmul.f32 %v1807, %v1181
    %v2050 = vmul.f32 %v1807, %v1532
    %v2051 = vmul.f32 %v1807, %v1534
    %v2052 = vmul.f32 %v1807, %v1183
    %v2053 = vmul.f32 %v1807, %v1185
    %v2054 = vmul.f32 %v1807, %v1536
    %v2055 = vmul.f32 %v1807, %v1538
    %v2056 = vmul.f32 %v1807, %v1189
    %v2057 = vmul.f32 %v1807, %v1191
    %v2058 = vmul.f32 %v1807, %v1542
    %v2059 = vmul.f32 %v1807, %v1544
    %v2060 = vmul.f32 %v1807, %v1193
    %v2061 = vmul.f32 %v1807, %v1195
    %v2062 = vmul.f32 %v1807, %v1546
    %v2063 = vmul.f32 %v1807, %v1548
    %v2064 = vsel %vm1551, %v879, %v1808
    %v2065 = vsel %vm1552, %v881, %v1809
    %v2066 = vsel %vm1553, %v1232, %v1810
    %v2067 = vsel %vm1554, %v1234, %v1811
    %v2068 = vsel %vm1555, %v883, %v1812
    %v2069 = vsel %vm1556, %v885, %v1813
    %v2070 = vsel %vm1557, %v1236, %v1814
    %v2071 = vsel %vm1558, %v1238, %v1815
    %v2072 = vsel %vm1559, %v889, %v1816
    %v2073 = vsel %vm1560, %v891, %v1817
    %v2074 = vsel %vm1561, %v1242, %v1818
    %v2075 = vsel %vm1562, %v1244, %v1819
    %v2076 = vsel %vm1563, %v893, %v1820
    %v2077 = vsel %vm1564, %v895, %v1821
    %v2078 = vsel %vm1565, %v1246, %v1822
    %v2079 = vsel %vm1566, %v1248, %v1823
    %v2080 = vsel %vm1567, %v899, %v1824
    %v2081 = vsel %vm1568, %v901, %v1825
    %v2082 = vsel %vm1569, %v1252, %v1826
    %v2083 = vsel %vm1570, %v1254, %v1827
    %v2084 = vsel %vm1571, %v903, %v1828
    %v2085 = vsel %vm1572, %v905, %v1829
    %v2086 = vsel %vm1573, %v1256, %v1830
    %v2087 = vsel %vm1574, %v1258, %v1831
    %v2088 = vsel %vm1575, %v909, %v1832
    %v2089 = vsel %vm1576, %v911, %v1833
    %v2090 = vsel %vm1577, %v1262, %v1834
    %v2091 = vsel %vm1578, %v1264, %v1835
    %v2092 = vsel %vm1579, %v913, %v1836
    %v2093 = vsel %vm1580, %v915, %v1837
    %v2094 = vsel %vm1581, %v1266, %v1838
    %v2095 = vsel %vm1582, %v1268, %v1839
    %v2096 = vsel %vm1583, %v919, %v1840
    %v2097 = vsel %vm1584, %v921, %v1841
    %v2098 = vsel %vm1585, %v1272, %v1842
    %v2099 = vsel %vm1586, %v1274, %v1843
    %v2100 = vsel %vm1587, %v923, %v1844
    %v2101 = vsel %vm1588, %v925, %v1845
    %v2102 = vsel %vm1589, %v1276, %v1846
    %v2103 = vsel %vm1590, %v1278, %v1847
    %v2104 = vsel %vm1591, %v929, %v1848
    %v2105 = vsel %vm1592, %v931, %v1849
    %v2106 = vsel %vm1593, %v1282, %v1850
    %v2107 = vsel %vm1594, %v1284, %v1851
    %v2108 = vsel %vm1595, %v933, %v1852
    %v2109 = vsel %vm1596, %v935, %v1853
    %v2110 = vsel %vm1597, %v1286, %v1854
    %v2111 = vsel %vm1598, %v1288, %v1855
    %v2112 = vsel %vm1599, %v939, %v1856
    %v2113 = vsel %vm1600, %v941, %v1857
    %v2114 = vsel %vm1601, %v1292, %v1858
    %v2115 = vsel %vm1602, %v1294, %v1859
    %v2116 = vsel %vm1603, %v943, %v1860
    %v2117 = vsel %vm1604, %v945, %v1861
    %v2118 = vsel %vm1605, %v1296, %v1862
    %v2119 = vsel %vm1606, %v1298, %v1863
    %v2120 = vsel %vm1607, %v949, %v1864
    %v2121 = vsel %vm1608, %v951, %v1865
    %v2122 = vsel %vm1609, %v1302, %v1866
    %v2123 = vsel %vm1610, %v1304, %v1867
    %v2124 = vsel %vm1611, %v953, %v1868
    %v2125 = vsel %vm1612, %v955, %v1869
    %v2126 = vsel %vm1613, %v1306, %v1870
    %v2127 = vsel %vm1614, %v1308, %v1871
    %v2128 = vsel %vm1615, %v959, %v1872
    %v2129 = vsel %vm1616, %v961, %v1873
    %v2130 = vsel %vm1617, %v1312, %v1874
    %v2131 = vsel %vm1618, %v1314, %v1875
    %v2132 = vsel %vm1619, %v963, %v1876
    %v2133 = vsel %vm1620, %v965, %v1877
    %v2134 = vsel %vm1621, %v1316, %v1878
    %v2135 = vsel %vm1622, %v1318, %v1879
    %v2136 = vsel %vm1623, %v969, %v1880
    %v2137 = vsel %vm1624, %v971, %v1881
    %v2138 = vsel %vm1625, %v1322, %v1882
    %v2139 = vsel %vm1626, %v1324, %v1883
    %v2140 = vsel %vm1627, %v973, %v1884
    %v2141 = vsel %vm1628, %v975, %v1885
    %v2142 = vsel %vm1629, %v1326, %v1886
    %v2143 = vsel %vm1630, %v1328, %v1887
    %v2144 = vsel %vm1631, %v979, %v1888
    %v2145 = vsel %vm1632, %v981, %v1889
    %v2146 = vsel %vm1633, %v1332, %v1890
    %v2147 = vsel %vm1634, %v1334, %v1891
    %v2148 = vsel %vm1635, %v983, %v1892
    %v2149 = vsel %vm1636, %v985, %v1893
    %v2150 = vsel %vm1637, %v1336, %v1894
    %v2151 = vsel %vm1638, %v1338, %v1895
    %v2152 = vsel %vm1639, %v989, %v1896
    %v2153 = vsel %vm1640, %v991, %v1897
    %v2154 = vsel %vm1641, %v1342, %v1898
    %v2155 = vsel %vm1642, %v1344, %v1899
    %v2156 = vsel %vm1643, %v993, %v1900
    %v2157 = vsel %vm1644, %v995, %v1901
    %v2158 = vsel %vm1645, %v1346, %v1902
    %v2159 = vsel %vm1646, %v1348, %v1903
    %v2160 = vsel %vm1647, %v999, %v1904
    %v2161 = vsel %vm1648, %v1001, %v1905
    %v2162 = vsel %vm1649, %v1352, %v1906
    %v2163 = vsel %vm1650, %v1354, %v1907
    %v2164 = vsel %vm1651, %v1003, %v1908
    %v2165 = vsel %vm1652, %v1005, %v1909
    %v2166 = vsel %vm1653, %v1356, %v1910
    %v2167 = vsel %vm1654, %v1358, %v1911
    %v2168 = vsel %vm1655, %v1009, %v1912
    %v2169 = vsel %vm1656, %v1011, %v1913
    %v2170 = vsel %vm1657, %v1362, %v1914
    %v2171 = vsel %vm1658, %v1364, %v1915
    %v2172 = vsel %vm1659, %v1013, %v1916
    %v2173 = vsel %vm1660, %v1015, %v1917
    %v2174 = vsel %vm1661, %v1366, %v1918
    %v2175 = vsel %vm1662, %v1368, %v1919
    %v2176 = vsel %vm1663, %v1019, %v1920
    %v2177 = vsel %vm1664, %v1021, %v1921
    %v2178 = vsel %vm1665, %v1372, %v1922
    %v2179 = vsel %vm1666, %v1374, %v1923
    %v2180 = vsel %vm1667, %v1023, %v1924
    %v2181 = vsel %vm1668, %v1025, %v1925
    %v2182 = vsel %vm1669, %v1376, %v1926
    %v2183 = vsel %vm1670, %v1378, %v1927
    %v2184 = vsel %vm1671, %v1029, %v1928
    %v2185 = vsel %vm1672, %v1031, %v1929
    %v2186 = vsel %vm1673, %v1382, %v1930
    %v2187 = vsel %vm1674, %v1384, %v1931
    %v2188 = vsel %vm1675, %v1033, %v1932
    %v2189 = vsel %vm1676, %v1035, %v1933
    %v2190 = vsel %vm1677, %v1386, %v1934
    %v2191 = vsel %vm1678, %v1388, %v1935
    %v2192 = vsel %vm1679, %v1039, %v1936
    %v2193 = vsel %vm1680, %v1041, %v1937
    %v2194 = vsel %vm1681, %v1392, %v1938
    %v2195 = vsel %vm1682, %v1394, %v1939
    %v2196 = vsel %vm1683, %v1043, %v1940
    %v2197 = vsel %vm1684, %v1045, %v1941
    %v2198 = vsel %vm1685, %v1396, %v1942
    %v2199 = vsel %vm1686, %v1398, %v1943
    %v2200 = vsel %vm1687, %v1049, %v1944
    %v2201 = vsel %vm1688, %v1051, %v1945
    %v2202 = vsel %vm1689, %v1402, %v1946
    %v2203 = vsel %vm1690, %v1404, %v1947
    %v2204 = vsel %vm1691, %v1053, %v1948
    %v2205 = vsel %vm1692, %v1055, %v1949
    %v2206 = vsel %vm1693, %v1406, %v1950
    %v2207 = vsel %vm1694, %v1408, %v1951
    %v2208 = vsel %vm1695, %v1059, %v1952
    %v2209 = vsel %vm1696, %v1061, %v1953
    %v2210 = vsel %vm1697, %v1412, %v1954
    %v2211 = vsel %vm1698, %v1414, %v1955
    %v2212 = vsel %vm1699, %v1063, %v1956
    %v2213 = vsel %vm1700, %v1065, %v1957
    %v2214 = vsel %vm1701, %v1416, %v1958
    %v2215 = vsel %vm1702, %v1418, %v1959
    %v2216 = vsel %vm1703, %v1069, %v1960
    %v2217 = vsel %vm1704, %v1071, %v1961
    %v2218 = vsel %vm1705, %v1422, %v1962
    %v2219 = vsel %vm1706, %v1424, %v1963
    %v2220 = vsel %vm1707, %v1073, %v1964
    %v2221 = vsel %vm1708, %v1075, %v1965
    %v2222 = vsel %vm1709, %v1426, %v1966
    %v2223 = vsel %vm1710, %v1428, %v1967
    %v2224 = vsel %vm1711, %v1079, %v1968
    %v2225 = vsel %vm1712, %v1081, %v1969
    %v2226 = vsel %vm1713, %v1432, %v1970
    %v2227 = vsel %vm1714, %v1434, %v1971
    %v2228 = vsel %vm1715, %v1083, %v1972
    %v2229 = vsel %vm1716, %v1085, %v1973
    %v2230 = vsel %vm1717, %v1436, %v1974
    %v2231 = vsel %vm1718, %v1438, %v1975
    %v2232 = vsel %vm1719, %v1089, %v1976
    %v2233 = vsel %vm1720, %v1091, %v1977
    %v2234 = vsel %vm1721, %v1442, %v1978
    %v2235 = vsel %vm1722, %v1444, %v1979
    %v2236 = vsel %vm1723, %v1093, %v1980
    %v2237 = vsel %vm1724, %v1095, %v1981
    %v2238 = vsel %vm1725, %v1446, %v1982
    %v2239 = vsel %vm1726, %v1448, %v1983
    %v2240 = vsel %vm1727, %v1099, %v1984
    %v2241 = vsel %vm1728, %v1101, %v1985
    %v2242 = vsel %vm1729, %v1452, %v1986
    %v2243 = vsel %vm1730, %v1454, %v1987
    %v2244 = vsel %vm1731, %v1103, %v1988
    %v2245 = vsel %vm1732, %v1105, %v1989
    %v2246 = vsel %vm1733, %v1456, %v1990
    %v2247 = vsel %vm1734, %v1458, %v1991
    %v2248 = vsel %vm1735, %v1109, %v1992
    %v2249 = vsel %vm1736, %v1111, %v1993
    %v2250 = vsel %vm1737, %v1462, %v1994
    %v2251 = vsel %vm1738, %v1464, %v1995
    %v2252 = vsel %vm1739, %v1113, %v1996
    %v2253 = vsel %vm1740, %v1115, %v1997
    %v2254 = vsel %vm1741, %v1466, %v1998
    %v2255 = vsel %vm1742, %v1468, %v1999
    %v2256 = vsel %vm1743, %v1119, %v2000
    %v2257 = vsel %vm1744, %v1121, %v2001
    %v2258 = vsel %vm1745, %v1472, %v2002
    %v2259 = vsel %vm1746, %v1474, %v2003
    %v2260 = vsel %vm1747, %v1123, %v2004
    %v2261 = vsel %vm1748, %v1125, %v2005
    %v2262 = vsel %vm1749, %v1476, %v2006
    %v2263 = vsel %vm1750, %v1478, %v2007
    %v2264 = vsel %vm1751, %v1129, %v2008
    %v2265 = vsel %vm1752, %v1131, %v2009
    %v2266 = vsel %vm1753, %v1482, %v2010
    %v2267 = vsel %vm1754, %v1484, %v2011
    %v2268 = vsel %vm1755, %v1133, %v2012
    %v2269 = vsel %vm1756, %v1135, %v2013
    %v2270 = vsel %vm1757, %v1486, %v2014
    %v2271 = vsel %vm1758, %v1488, %v2015
    %v2272 = vsel %vm1759, %v1139, %v2016
    %v2273 = vsel %vm1760, %v1141, %v2017
    %v2274 = vsel %vm1761, %v1492, %v2018
    %v2275 = vsel %vm1762, %v1494, %v2019
    %v2276 = vsel %vm1763, %v1143, %v2020
    %v2277 = vsel %vm1764, %v1145, %v2021
    %v2278 = vsel %vm1765, %v1496, %v2022
    %v2279 = vsel %vm1766, %v1498, %v2023
    %v2280 = vsel %vm1767, %v1149, %v2024
    %v2281 = vsel %vm1768, %v1151, %v2025
    %v2282 = vsel %vm1769, %v1502, %v2026
    %v2283 = vsel %vm1770, %v1504, %v2027
    %v2284 = vsel %vm1771, %v1153, %v2028
    %v2285 = vsel %vm1772, %v1155, %v2029
    %v2286 = vsel %vm1773, %v1506, %v2030
    %v2287 = vsel %vm1774, %v1508, %v2031
    %v2288 = vsel %vm1775, %v1159, %v2032
    %v2289 = vsel %vm1776, %v1161, %v2033
    %v2290 = vsel %vm1777, %v1512, %v2034
    %v2291 = vsel %vm1778, %v1514, %v2035
    %v2292 = vsel %vm1779, %v1163, %v2036
    %v2293 = vsel %vm1780, %v1165, %v2037
    %v2294 = vsel %vm1781, %v1516, %v2038
    %v2295 = vsel %vm1782, %v1518, %v2039
    %v2296 = vsel %vm1783, %v1169, %v2040
    %v2297 = vsel %vm1784, %v1171, %v2041
    %v2298 = vsel %vm1785, %v1522, %v2042
    %v2299 = vsel %vm1786, %v1524, %v2043
    %v2300 = vsel %vm1787, %v1173, %v2044
    %v2301 = vsel %vm1788, %v1175, %v2045
    %v2302 = vsel %vm1789, %v1526, %v2046
    %v2303 = vsel %vm1790, %v1528, %v2047
    %v2304 = vsel %vm1791, %v1179, %v2048
    %v2305 = vsel %vm1792, %v1181, %v2049
    %v2306 = vsel %vm1793, %v1532, %v2050
    %v2307 = vsel %vm1794, %v1534, %v2051
    %v2308 = vsel %vm1795, %v1183, %v2052
    %v2309 = vsel %vm1796, %v1185, %v2053
    %v2310 = vsel %vm1797, %v1536, %v2054
    %v2311 = vsel %vm1798, %v1538, %v2055
    %v2312 = vsel %vm1799, %v1189, %v2056
    %v2313 = vsel %vm1800, %v1191, %v2057
    %v2314 = vsel %vm1801, %v1542, %v2058
    %v2315 = vsel %vm1802, %v1544, %v2059
    %v2316 = vsel %vm1803, %v1193, %v2060
    %v2317 = vsel %vm1804, %v1195, %v2061
    %v2318 = vsel %vm1805, %v1546, %v2062
    %v2319 = vsel %vm1806, %v1548, %v2063
    %v2320 = vld [vmem:[%s4] sm:$0xf]
    %s2321 = sld [smem:[#allocation2 + $0x1]]
    %v2322 = vstv %s2321
    %v2324 = vlaneseq
    %v2325 = vshrl.u32 %v2324, 7
    %v2326 = vsub.s32 0, %v2325
    %v2327 = vrot.slane %v2320, %v2326
    %v2328 = vlaneseq
    %v2329 = vshrl.u32 %v2328, 7
    %v2330 = vsub.s32 1, %v2329
    %v2331 = vrot.slane %v2320, %v2330
    %v2332 = vlaneseq
    %v2333 = vshrl.u32 %v2332, 7
    %v2334 = vsub.s32 2, %v2333
    %v2335 = vrot.slane %v2320, %v2334
    %v2336 = vlaneseq
    %v2337 = vshrl.u32 %v2336, 7
    %v2338 = vsub.s32 3, %v2337
    %v2339 = vrot.slane %v2320, %v2338
    %2344 = vmatprep.subr.mxu0 %v2065
    %2345 = vmatpush1.msra.mxu0 %v2064
    %2346 = vmatprep.subr.mxu0 %v2069
    %2347 = vmatpush1.msra.mxu0 %v2068
    %2348 = vmatprep.subr.mxu0 %v2073
    %2349 = vmatpush1.msra.mxu0 %v2072
    %2350 = vmatprep.subr.mxu0 %v2077
    %2351 = vmatpush1.msra.mxu0 %v2076
    %2352 = vmatprep.subr.mxu0 %v2081
    %2353 = vmatpush1.msra.mxu0 %v2080
    %2354 = vmatprep.subr.mxu0 %v2085
    %2355 = vmatpush1.msra.mxu0 %v2084
    %2356 = vmatprep.subr.mxu0 %v2089
    %2357 = vmatpush1.msra.mxu0 %v2088
    %2358 = vmatprep.subr.mxu0 %v2093
    %2359 = vmatpush1.msra.mxu0 %v2092
    %2360 = vmatprep.subr.mxu0 %v2097
    %2361 = vmatpush1.msra.mxu0 %v2096
    %2362 = vmatprep.subr.mxu0 %v2101
    %2363 = vmatpush1.msra.mxu0 %v2100
    %2364 = vmatprep.subr.mxu0 %v2105
    %2365 = vmatpush1.msra.mxu0 %v2104
    %2366 = vmatprep.subr.mxu0 %v2109
    %2367 = vmatpush1.msra.mxu0 %v2108
    %2368 = vmatprep.subr.mxu0 %v2113
    %2369 = vmatpush1.msra.mxu0 %v2112
    %2370 = vmatprep.subr.mxu0 %v2117
    %2371 = vmatpush1.msra.mxu0 %v2116
    %2372 = vmatprep.subr.mxu0 %v2121
    %2373 = vmatpush1.msra.mxu0 %v2120
    %2374 = vmatprep.subr.mxu0 %v2125
    %2375 = vmatpush1.msra.mxu0 %v2124
    %2376 = vmatprep.subr.mxu0 %v2129
    %2377 = vmatpush1.msra.mxu0 %v2128
    %2378 = vmatprep.subr.mxu0 %v2133
    %2379 = vmatpush1.msra.mxu0 %v2132
    %2380 = vmatprep.subr.mxu0 %v2137
    %2381 = vmatpush1.msra.mxu0 %v2136
    %2382 = vmatprep.subr.mxu0 %v2141
    %2383 = vmatpush1.msra.mxu0 %v2140
    %2384 = vmatprep.subr.mxu0 %v2145
    %2385 = vmatpush1.msra.mxu0 %v2144
    %2386 = vmatprep.subr.mxu0 %v2149
    %2387 = vmatpush1.msra.mxu0 %v2148
    %2388 = vmatprep.subr.mxu0 %v2153
    %2389 = vmatpush1.msra.mxu0 %v2152
    %2390 = vmatprep.subr.mxu0 %v2157
    %2391 = vmatpush1.msra.mxu0 %v2156
    %2392 = vmatprep.subr.mxu0 %v2161
    %2393 = vmatpush1.msra.mxu0 %v2160
    %2394 = vmatprep.subr.mxu0 %v2165
    %2395 = vmatpush1.msra.mxu0 %v2164
    %2396 = vmatprep.subr.mxu0 %v2169
    %2397 = vmatpush1.msra.mxu0 %v2168
    %2398 = vmatprep.subr.mxu0 %v2173
    %2399 = vmatpush1.msra.mxu0 %v2172
    %2400 = vmatprep.subr.mxu0 %v2177
    %2401 = vmatpush1.msra.mxu0 %v2176
    %2402 = vmatprep.subr.mxu0 %v2181
    %2403 = vmatpush1.msra.mxu0 %v2180
    %2404 = vmatprep.subr.mxu0 %v2185
    %2405 = vmatpush1.msra.mxu0 %v2184
    %2406 = vmatprep.subr.mxu0 %v2189
    %2407 = vmatpush1.msra.mxu0 %v2188
    %2408 = vmatprep.mubr.f32.mxu0 %v2331
    %2409 = vmatmul.mubr.f32.gmra.mrb[0].mxu0 %v2327
    %v2410 = vpop.f32.mrb[0].mxu0
    %v2411 = vadd.f32 %v2322, %v2410
    %v2412 = vpop.f32.mrb[0].mxu0
    %v2413 = vadd.f32 %v2322, %v2412
    %2414 = vdwg.mxu0
    %2415 = vmatprep.subr.mxu0 %v2193
    %2416 = vmatpush1.msra.mxu0 %v2192
    %2417 = vmatprep.subr.mxu0 %v2197
    %2418 = vmatpush1.msra.mxu0 %v2196
    %2419 = vmatprep.subr.mxu0 %v2201
    %2420 = vmatpush1.msra.mxu0 %v2200
    %2421 = vmatprep.subr.mxu0 %v2205
    %2422 = vmatpush1.msra.mxu0 %v2204
    %2423 = vmatprep.subr.mxu0 %v2209
    %2424 = vmatpush1.msra.mxu0 %v2208
    %2425 = vmatprep.subr.mxu0 %v2213
    %2426 = vmatpush1.msra.mxu0 %v2212
    %2427 = vmatprep.subr.mxu0 %v2217
    %2428 = vmatpush1.msra.mxu0 %v2216
    %2429 = vmatprep.subr.mxu0 %v2221
    %2430 = vmatpush1.msra.mxu0 %v2220
    %2431 = vmatprep.subr.mxu0 %v2225
    %2432 = vmatpush1.msra.mxu0 %v2224
    %2433 = vmatprep.subr.mxu0 %v2229
    %2434 = vmatpush1.msra.mxu0 %v2228
    %2435 = vmatprep.subr.mxu0 %v2233
    %2436 = vmatpush1.msra.mxu0 %v2232
    %2437 = vmatprep.subr.mxu0 %v2237
    %2438 = vmatpush1.msra.mxu0 %v2236
    %2439 = vmatprep.subr.mxu0 %v2241
    %2440 = vmatpush1.msra.mxu0 %v2240
    %2441 = vmatprep.subr.mxu0 %v2245
    %2442 = vmatpush1.msra.mxu0 %v2244
    %2443 = vmatprep.subr.mxu0 %v2249
    %2444 = vmatpush1.msra.mxu0 %v2248
    %2445 = vmatprep.subr.mxu0 %v2253
    %2446 = vmatpush1.msra.mxu0 %v2252
    %2447 = vmatprep.subr.mxu0 %v2257
    %2448 = vmatpush1.msra.mxu0 %v2256
    %2449 = vmatprep.subr.mxu0 %v2261
    %2450 = vmatpush1.msra.mxu0 %v2260
    %2451 = vmatprep.subr.mxu0 %v2265
    %2452 = vmatpush1.msra.mxu0 %v2264
    %2453 = vmatprep.subr.mxu0 %v2269
    %2454 = vmatpush1.msra.mxu0 %v2268
    %2455 = vmatprep.subr.mxu0 %v2273
    %2456 = vmatpush1.msra.mxu0 %v2272
    %2457 = vmatprep.subr.mxu0 %v2277
    %2458 = vmatpush1.msra.mxu0 %v2276
    %2459 = vmatprep.subr.mxu0 %v2281
    %2460 = vmatpush1.msra.mxu0 %v2280
    %2461 = vmatprep.subr.mxu0 %v2285
    %2462 = vmatpush1.msra.mxu0 %v2284
    %2463 = vmatprep.subr.mxu0 %v2289
    %2464 = vmatpush1.msra.mxu0 %v2288
    %2465 = vmatprep.subr.mxu0 %v2293
    %2466 = vmatpush1.msra.mxu0 %v2292
    %2467 = vmatprep.subr.mxu0 %v2297
    %2468 = vmatpush1.msra.mxu0 %v2296
    %2469 = vmatprep.subr.mxu0 %v2301
    %2470 = vmatpush1.msra.mxu0 %v2300
    %2471 = vmatprep.subr.mxu0 %v2305
    %2472 = vmatpush1.msra.mxu0 %v2304
    %2473 = vmatprep.subr.mxu0 %v2309
    %2474 = vmatpush1.msra.mxu0 %v2308
    %2475 = vmatprep.subr.mxu0 %v2313
    %2476 = vmatpush1.msra.mxu0 %v2312
    %2477 = vmatprep.subr.mxu0 %v2317
    %2478 = vmatpush1.msra.mxu0 %v2316
    %2479 = vmatprep.mubr.f32.mxu0 %v2339
    %2480 = vmatmul.mubr.f32.gmra.mrb[0].mxu0 %v2335
    %v2481 = vpop.f32.mrb[0].mxu0
    %v2482 = vadd.f32 %v2411, %v2481
    %v2483 = vpop.f32.mrb[0].mxu0
    %v2484 = vadd.f32 %v2413, %v2483
    %2485 = vdwg.mxu0
    %2486 = vmatprep.subr.mxu0 %v2067
    %2487 = vmatpush1.msra.mxu0 %v2066
    %2488 = vmatprep.subr.mxu0 %v2071
    %2489 = vmatpush1.msra.mxu0 %v2070
    %2490 = vmatprep.subr.mxu0 %v2075
    %2491 = vmatpush1.msra.mxu0 %v2074
    %2492 = vmatprep.subr.mxu0 %v2079
    %2493 = vmatpush1.msra.mxu0 %v2078
    %2494 = vmatprep.subr.mxu0 %v2083
    %2495 = vmatpush1.msra.mxu0 %v2082
    %2496 = vmatprep.subr.mxu0 %v2087
    %2497 = vmatpush1.msra.mxu0 %v2086
    %2498 = vmatprep.subr.mxu0 %v2091
    %2499 = vmatpush1.msra.mxu0 %v2090
    %2500 = vmatprep.subr.mxu0 %v2095
    %2501 = vmatpush1.msra.mxu0 %v2094
    %2502 = vmatprep.subr.mxu0 %v2099
    %2503 = vmatpush1.msra.mxu0 %v2098
    %2504 = vmatprep.subr.mxu0 %v2103
    %2505 = vmatpush1.msra.mxu0 %v2102
    %2506 = vmatprep.subr.mxu0 %v2107
    %2507 = vmatpush1.msra.mxu0 %v2106
    %2508 = vmatprep.subr.mxu0 %v2111
    %2509 = vmatpush1.msra.mxu0 %v2110
    %2510 = vmatprep.subr.mxu0 %v2115
    %2511 = vmatpush1.msra.mxu0 %v2114
    %2512 = vmatprep.subr.mxu0 %v2119
    %2513 = vmatpush1.msra.mxu0 %v2118
    %2514 = vmatprep.subr.mxu0 %v2123
    %2515 = vmatpush1.msra.mxu0 %v2122
    %2516 = vmatprep.subr.mxu0 %v2127
    %2517 = vmatpush1.msra.mxu0 %v2126
    %2518 = vmatprep.subr.mxu0 %v2131
    %2519 = vmatpush1.msra.mxu0 %v2130
    %2520 = vmatprep.subr.mxu0 %v2135
    %2521 = vmatpush1.msra.mxu0 %v2134
    %2522 = vmatprep.subr.mxu0 %v2139
    %2523 = vmatpush1.msra.mxu0 %v2138
    %2524 = vmatprep.subr.mxu0 %v2143
    %2525 = vmatpush1.msra.mxu0 %v2142
    %2526 = vmatprep.subr.mxu0 %v2147
    %2527 = vmatpush1.msra.mxu0 %v2146
    %2528 = vmatprep.subr.mxu0 %v2151
    %2529 = vmatpush1.msra.mxu0 %v2150
    %2530 = vmatprep.subr.mxu0 %v2155
    %2531 = vmatpush1.msra.mxu0 %v2154
    %2532 = vmatprep.subr.mxu0 %v2159
    %2533 = vmatpush1.msra.mxu0 %v2158
    %2534 = vmatprep.subr.mxu0 %v2163
    %2535 = vmatpush1.msra.mxu0 %v2162
    %2536 = vmatprep.subr.mxu0 %v2167
    %2537 = vmatpush1.msra.mxu0 %v2166
    %2538 = vmatprep.subr.mxu0 %v2171
    %2539 = vmatpush1.msra.mxu0 %v2170
    %2540 = vmatprep.subr.mxu0 %v2175
    %2541 = vmatpush1.msra.mxu0 %v2174
    %2542 = vmatprep.subr.mxu0 %v2179
    %2543 = vmatpush1.msra.mxu0 %v2178
    %2544 = vmatprep.subr.mxu0 %v2183
    %2545 = vmatpush1.msra.mxu0 %v2182
    %2546 = vmatprep.subr.mxu0 %v2187
    %2547 = vmatpush1.msra.mxu0 %v2186
    %2548 = vmatprep.subr.mxu0 %v2191
    %2549 = vmatpush1.msra.mxu0 %v2190
    %2550 = vmatprep.mubr.f32.mxu0 %v2331
    %2551 = vmatmul.mubr.f32.gmra.mrb[0].mxu0 %v2327
    %v2552 = vpop.f32.mrb[0].mxu0
    %v2553 = vadd.f32 %v2322, %v2552
    %v2554 = vpop.f32.mrb[0].mxu0
    %v2555 = vadd.f32 %v2322, %v2554
    %2556 = vdwg.mxu0
    %2557 = vmatprep.subr.mxu0 %v2195
    %2558 = vmatpush1.msra.mxu0 %v2194
    %2559 = vmatprep.subr.mxu0 %v2199
    %2560 = vmatpush1.msra.mxu0 %v2198
    %2561 = vmatprep.subr.mxu0 %v2203
    %2562 = vmatpush1.msra.mxu0 %v2202
    %2563 = vmatprep.subr.mxu0 %v2207
    %2564 = vmatpush1.msra.mxu0 %v2206
    %2565 = vmatprep.subr.mxu0 %v2211
    %2566 = vmatpush1.msra.mxu0 %v2210
    %2567 = vmatprep.subr.mxu0 %v2215
    %2568 = vmatpush1.msra.mxu0 %v2214
    %2569 = vmatprep.subr.mxu0 %v2219
    %2570 = vmatpush1.msra.mxu0 %v2218
    %2571 = vmatprep.subr.mxu0 %v2223
    %2572 = vmatpush1.msra.mxu0 %v2222
    %2573 = vmatprep.subr.mxu0 %v2227
    %2574 = vmatpush1.msra.mxu0 %v2226
    %2575 = vmatprep.subr.mxu0 %v2231
    %2576 = vmatpush1.msra.mxu0 %v2230
    %2577 = vmatprep.subr.mxu0 %v2235
    %2578 = vmatpush1.msra.mxu0 %v2234
    %2579 = vmatprep.subr.mxu0 %v2239
    %2580 = vmatpush1.msra.mxu0 %v2238
    %2581 = vmatprep.subr.mxu0 %v2243
    %2582 = vmatpush1.msra.mxu0 %v2242
    %2583 = vmatprep.subr.mxu0 %v2247
    %2584 = vmatpush1.msra.mxu0 %v2246
    %2585 = vmatprep.subr.mxu0 %v2251
    %2586 = vmatpush1.msra.mxu0 %v2250
    %2587 = vmatprep.subr.mxu0 %v2255
    %2588 = vmatpush1.msra.mxu0 %v2254
    %2589 = vmatprep.subr.mxu0 %v2259
    %2590 = vmatpush1.msra.mxu0 %v2258
    %2591 = vmatprep.subr.mxu0 %v2263
    %2592 = vmatpush1.msra.mxu0 %v2262
    %2593 = vmatprep.subr.mxu0 %v2267
    %2594 = vmatpush1.msra.mxu0 %v2266
    %2595 = vmatprep.subr.mxu0 %v2271
    %2596 = vmatpush1.msra.mxu0 %v2270
    %2597 = vmatprep.subr.mxu0 %v2275
    %2598 = vmatpush1.msra.mxu0 %v2274
    %2599 = vmatprep.subr.mxu0 %v2279
    %2600 = vmatpush1.msra.mxu0 %v2278
    %2601 = vmatprep.subr.mxu0 %v2283
    %2602 = vmatpush1.msra.mxu0 %v2282
    %2603 = vmatprep.subr.mxu0 %v2287
    %2604 = vmatpush1.msra.mxu0 %v2286
    %2605 = vmatprep.subr.mxu0 %v2291
    %2606 = vmatpush1.msra.mxu0 %v2290
    %2607 = vmatprep.subr.mxu0 %v2295
    %2608 = vmatpush1.msra.mxu0 %v2294
    %2609 = vmatprep.subr.mxu0 %v2299
    %2610 = vmatpush1.msra.mxu0 %v2298
    %2611 = vmatprep.subr.mxu0 %v2303
    %2612 = vmatpush1.msra.mxu0 %v2302
    %2613 = vmatprep.subr.mxu0 %v2307
    %2614 = vmatpush1.msra.mxu0 %v2306
    %2615 = vmatprep.subr.mxu0 %v2311
    %2616 = vmatpush1.msra.mxu0 %v2310
    %2617 = vmatprep.subr.mxu0 %v2315
    %2618 = vmatpush1.msra.mxu0 %v2314
    %2619 = vmatprep.subr.mxu0 %v2319
    %2620 = vmatpush1.msra.mxu0 %v2318
    %2621 = vmatprep.mubr.f32.mxu0 %v2339
    %2622 = vmatmul.mubr.f32.gmra.mrb[0].mxu0 %v2335
    %v2623 = vpop.f32.mrb[0].mxu0
    %v2624 = vadd.f32 %v2553, %v2623
    %v2625 = vpop.f32.mrb[0].mxu0
    %v2626 = vadd.f32 %v2555, %v2625
    %2627 = vdwg.mxu0
    %v2628 = vxor.u32 %v2482, 2147483648
    %v2629 = vxor.u32 %v2484, 2147483648
    %v2630 = vxor.u32 %v2624, 2147483648
    %v2631 = vxor.u32 %v2626, 2147483648
    %v2632 = vmul.f32 %v2628, 1.442695
    %v2633 = vpow.pop %v2632
    %v2634 = vmul.f32 %v2629, 1.442695
    %v2635 = vpow.pop %v2634
    %v2636 = vmul.f32 %v2630, 1.442695
    %v2637 = vpow.pop %v2636
    %v2638 = vmul.f32 %v2631, 1.442695
    %v2639 = vpow.pop %v2638
    %v2640 = vadd.f32 %v2633, 1.0
    %v2641 = vadd.f32 %v2635, 1.0
    %v2642 = vadd.f32 %v2637, 1.0
    %v2643 = vadd.f32 %v2639, 1.0
    %v2644 = vrcp.pop %v2640
    %v2645 = vmul.f32 1.0, %v2644
    %v2646 = vrcp.pop %v2641
    %v2647 = vmul.f32 1.0, %v2646
    %v2648 = vrcp.pop %v2642
    %v2649 = vmul.f32 1.0, %v2648
    %v2650 = vrcp.pop %v2643
    %v2651 = vmul.f32 1.0, %v2650
    %v2652 = vld [vmem:[%s5] ss:$2 sm:$0xf]
    %s2653 = scalar_lea.vmem %s5, 1
    %v2654 = vld [vmem:[%s2653] ss:$2 sm:$0xf]
    %v2655 = vsub.f32 1.0, %v2645
    %v2656 = vsub.f32 1.0, %v2647
    %v2657 = vsub.f32 1.0, %v2649
    %v2658 = vsub.f32 1.0, %v2651
    %v2659 = vadd.f32 %v2655, 1e-09
    %v2660 = vadd.f32 %v2656, 1e-09
    %v2661 = vadd.f32 %v2657, 1e-09
    %v2662 = vadd.f32 %v2658, 1e-09
    %v2663 = vlog2.pop %v2659
    %v2664 = vmul.f32 %v2663, 0.6931472
    %v2665 = vlog2.pop %v2660
    %v2666 = vmul.f32 %v2665, 0.6931472
    %v2667 = vlog2.pop %v2661
    %v2668 = vmul.f32 %v2667, 0.6931472
    %v2669 = vlog2.pop %v2662
    %v2670 = vmul.f32 %v2669, 0.6931472
    %v2672 = vlaneseq
    %v2673 = vshrl.u32 %v2672, 7
    %v2674 = vsub.s32 0, %v2673
    %v2675 = vrot.slane %v2652, %v2674
    %v2676 = vlaneseq
    %v2677 = vshrl.u32 %v2676, 7
    %v2678 = vsub.s32 1, %v2677
    %v2679 = vrot.slane %v2652, %v2678
    %v2680 = vlaneseq
    %v2681 = vshrl.u32 %v2680, 7
    %v2682 = vsub.s32 2, %v2681
    %v2683 = vrot.slane %v2652, %v2682
    %v2684 = vlaneseq
    %v2685 = vshrl.u32 %v2684, 7
    %v2686 = vsub.s32 3, %v2685
    %v2687 = vrot.slane %v2652, %v2686
    %v2692 = vadd.f32 %v2664, %v2675
    %v2693 = vadd.f32 %v2666, %v2679
    %v2694 = vadd.f32 %v2668, %v2683
    %v2695 = vadd.f32 %v2670, %v2687
    %v2696 = vadd.f32 %v2645, 1e-09
    %v2697 = vadd.f32 %v2647, 1e-09
    %v2698 = vadd.f32 %v2649, 1e-09
    %v2699 = vadd.f32 %v2651, 1e-09
    %v2700 = vlog2.pop %v2696
    %v2701 = vmul.f32 %v2700, 0.6931472
    %v2702 = vlog2.pop %v2697
    %v2703 = vmul.f32 %v2702, 0.6931472
    %v2704 = vlog2.pop %v2698
    %v2705 = vmul.f32 %v2704, 0.6931472
    %v2706 = vlog2.pop %v2699
    %v2707 = vmul.f32 %v2706, 0.6931472
    %v2709 = vlaneseq
    %v2710 = vshrl.u32 %v2709, 7
    %v2711 = vsub.s32 0, %v2710
    %v2712 = vrot.slane %v2654, %v2711
    %v2713 = vlaneseq
    %v2714 = vshrl.u32 %v2713, 7
    %v2715 = vsub.s32 1, %v2714
    %v2716 = vrot.slane %v2654, %v2715
    %v2717 = vlaneseq
    %v2718 = vshrl.u32 %v2717, 7
    %v2719 = vsub.s32 2, %v2718
    %v2720 = vrot.slane %v2654, %v2719
    %v2721 = vlaneseq
    %v2722 = vshrl.u32 %v2721, 7
    %v2723 = vsub.s32 3, %v2722
    %v2724 = vrot.slane %v2654, %v2723
    %v2729 = vadd.f32 %v2701, %v2712
    %v2730 = vadd.f32 %v2703, %v2716
    %v2731 = vadd.f32 %v2705, %v2720
    %v2732 = vadd.f32 %v2707, %v2724
    %vm2733 = vcmp.gt.f32.partialorder %v2729, %v2692
    %vm2734 = vcmp.gt.f32.partialorder %v2730, %v2693
    %vm2735 = vcmp.gt.f32.partialorder %v2731, %v2694
    %vm2736 = vcmp.gt.f32.partialorder %v2732, %v2695
    %v2737 = vsel %vm2733, 1, 0
    %v2738 = vsel %vm2734, 1, 0
    %v2739 = vsel %vm2735, 1, 0
    %v2740 = vsel %vm2736, 1, 0
    %v2741 = vcvt.s32.f32 %v2737
    %v2742 = vcvt.s32.f32 %v2738
    %v2743 = vcvt.s32.f32 %v2739
    %v2744 = vcvt.s32.f32 %v2740
    %v2749 = vcombine.low %v2645, %v2647
    %v2750 = vcombine.low %v2649, %v2651
    %v2752 = vunpack.c.l.s4 1966171168
    %v2753 = vunpack.c.0.s8 %v2752
    %v2754 = vlaneseq
    %v2755 = vshrl.u32 %v2754, 7
    %v2756 = vsub.s32 %v2753, %v2755
    %v2757 = vrot.slane %v2749, %v2756
    %v2759 = vunpack.c.l.s4 1966171168
    %v2760 = vunpack.c.0.s8 %v2759
    %v2761 = vlaneseq
    %v2762 = vshrl.u32 %v2761, 7
    %v2763 = vsub.s32 %v2760, %v2762
    %v2764 = vrot.slane %v2750, %v2763
    %v2765 = vcombine.low %v2757, %v2764
    %v2767 = vunpack.c.l.s4 1966171168
    %v2768 = vunpack.c.0.s8 %v2767
    %v2769 = vlaneseq
    %v2770 = vshrl.u32 %v2769, 7
    %v2771 = vsub.s32 %v2768, %v2770
    %v2772 = vrot.slane %v2765, %v2771
    %v2774 = vlaneseq
    %vm2775 = vcmp.ge.s32.totalorder %v2774, 0
    %vm2776 = vcmp.lt.s32.totalorder %v2774, 512
    %vm2777 = vmand %vm2775, %vm2776
    %2778 = vst.msk [vmem:[#allocation6] ss:$2 sm:$0xf] %vm2777, %v2772
    %v2783 = vcombine.low %v2741, %v2742
    %v2784 = vcombine.low %v2743, %v2744
    %v2786 = vunpack.c.l.s4 1966171168
    %v2787 = vunpack.c.0.s8 %v2786
    %v2788 = vlaneseq
    %v2789 = vshrl.u32 %v2788, 7
    %v2790 = vsub.s32 %v2787, %v2789
    %v2791 = vrot.slane %v2783, %v2790
    %v2793 = vunpack.c.l.s4 1966171168
    %v2794 = vunpack.c.0.s8 %v2793
    %v2795 = vlaneseq
    %v2796 = vshrl.u32 %v2795, 7
    %v2797 = vsub.s32 %v2794, %v2796
    %v2798 = vrot.slane %v2784, %v2797
    %v2799 = vcombine.low %v2791, %v2798
    %v2801 = vunpack.c.l.s4 1966171168
    %v2802 = vunpack.c.0.s8 %v2801
    %v2803 = vlaneseq
    %v2804 = vshrl.u32 %v2803, 7
    %v2805 = vsub.s32 %v2802, %v2804
    %v2806 = vrot.slane %v2799, %v2805
    %s2808 = scalar_lea.vmem [#allocation6], 1
    %2809 = vst.msk [vmem:[%s2808] ss:$2 sm:$0xf] %vm2777, %v2806
    // Predicated region
    $region71: #{tpu_custom_call.1} parent=1 // pred_check
      _
    $region72: #{tpu_custom_call.1} parent=1 // pred_check_branch
      %2811 = sbr.rel (0) target = $region74
    $region73: #{tpu_custom_call.1} parent=1 // pred_region
      %s2813 = ssub.s32 128, 128
      %2814 = vsyncadd [#allocation3], %s2813
      %s2816 = sshll.u32 [#allocation6], 4
      %s2817 = int_to_ptr.vmem [resolvable:$true] %s2816
      %2819 = dma.vmem_to_hbm [thread:$0]  %s2817, 128, %s6, [#allocation3]
    $region74: #{tpu_custom_call.1} parent=1 // pred_fallthru
      _
    // Predicated region
    $region75: #{tpu_custom_call.1} parent=1 // pred_check
      _
    $region76: #{tpu_custom_call.1} parent=1 // pred_check_branch
      %2821 = sbr.rel (0) target = $region78
    $region77: #{tpu_custom_call.1} parent=1 // pred_region
      %2822 = dma.done [#allocation3], 128
    $region78: #{tpu_custom_call.1} parent=1 // pred_fallthru
      _
    %2823 = vsyncpa [#allocation3], 1
    %2824 = vsyncpa [#allocation4], 1

</llo_original>
